<compile_context>
chip_gen: v7x
topology: tpu7x:2x2x1
jax: 0.10.0
libtpu: 0.0.40
codegen_flags: <defaults>
</compile_context>

<pallas_src>
import functools

import jax
import jax.numpy as jnp
from jax.experimental import pallas as pl
from jax.experimental.pallas import tpu as pltpu


def _round_up(x, m):
    return ((x + m - 1) // m) * m


# ---------------- fused residual Linear + add + SiLU (tiled over M) ----------------

def _residual_silu_kernel(x_ref, xs_ref, w_ref, b_ref, o_ref):
    # x: (TM, in_dim), xs: (TM, out_dim), w: (in_dim, out_dim), b: (1, out_dim)
    res = jnp.dot(x_ref[...], w_ref[...], preferred_element_type=jnp.float32) + b_ref[...]
    s = xs_ref[...] + res
    o_ref[...] = s * jax.nn.sigmoid(s)  # SiLU; sigmoid is numerically safe & uses EUP


def residual_silu(x2d, xs2d, w, b, *, block_m=512):
    """SiLU(xs2d + x2d @ w + b), tiled over rows (M = B*n*n)."""
    M, K = x2d.shape
    N = w.shape[1]
    tm = min(_round_up(block_m, 8), _round_up(M, 8))
    m_pad = _round_up(M, tm)
    if m_pad != M:
        x2d = jnp.pad(x2d, ((0, m_pad - M), (0, 0)))
        xs2d = jnp.pad(xs2d, ((0, m_pad - M), (0, 0)))

    out = pl.pallas_call(
        _residual_silu_kernel,
        out_shape=jax.ShapeDtypeStruct((m_pad, N), jnp.float32),
        grid=(m_pad // tm,),
        in_specs=[
            pl.BlockSpec((tm, K), lambda i: (i, 0)),
            pl.BlockSpec((tm, N), lambda i: (i, 0)),
            pl.BlockSpec((K, N), lambda i: (0, 0)),   # weights stay VMEM-resident
            pl.BlockSpec((1, N), lambda i: (0, 0)),
        ],
        out_specs=pl.BlockSpec((tm, N), lambda i: (i, 0)),
        compiler_params=pltpu.CompilerParams(
            dimension_semantics=("parallel",),        # megacore-shardable on v7x
            vmem_limit_bytes=32 * 1024 * 1024,        # tiles sized to fit on all gens
        ),
    )(x2d, xs2d, w, b)
    return out[:M]


# ------------- per-frequency complex contraction (tiled over F and B) --------------

def _spectral_mul_kernel(in_dim, ar_ref, ai_ref, wr_ref, wi_ref, or_ref, oi_ref):
    # a*: (in_dim, TB, TF)   w*: (in_dim, out_dim, TF)   o*: (TB, out_dim, TF)
    acc_r = jnp.zeros(or_ref.shape, jnp.float32)
    acc_i = jnp.zeros(oi_ref.shape, jnp.float32)
    for i in range(in_dim):          # static unroll; in_dim small & known at trace
        a_r = ar_ref[i]              # (TB, TF) contiguous leading-axis load
        a_i = ai_ref[i]
        w_r = wr_ref[i]              # (out_dim, TF)
        w_i = wi_ref[i]
        ar_b = a_r[:, None, :]
        ai_b = a_i[:, None, :]
        wr_b = w_r[None, :, :]
        wi_b = w_i[None, :, :]
        acc_r = acc_r + ar_b * wr_b - ai_b * wi_b
        acc_i = acc_i + ai_b * wr_b + ar_b * wi_b
    or_ref[...] = acc_r
    oi_ref[...] = acc_i


def spectral_mul(a_re, a_im, w_re, w_im, *, block_f=512, block_b=8):
    """o[b,o,f] = sum_i a[i,b,f] * w[i,o,f] (complex, split real/imag), f32 on VPU."""
    in_dim, B, F = a_re.shape
    out_dim = w_re.shape[1]

    # lane-dense frequency tiles (multiple of 128), padded with zeros
    tf = min(_round_up(block_f, 128), _round_up(F, 128))
    f_pad = _round_up(F, tf)
    # batch tile bounds the per-step working set (v7x: 64 MiB VMEM)
    if B <= block_b:
        tb, b_pad = B, B
    else:
        tb = _round_up(block_b, 8)
        b_pad = _round_up(B, tb)

    if f_pad != F:
        fp = ((0, 0), (0, 0), (0, f_pad - F))
        a_re, a_im = jnp.pad(a_re, fp), jnp.pad(a_im, fp)
        w_re, w_im = jnp.pad(w_re, fp), jnp.pad(w_im, fp)
    if b_pad != B:
        bp = ((0, 0), (0, b_pad - B), (0, 0))
        a_re, a_im = jnp.pad(a_re, bp), jnp.pad(a_im, bp)

    kernel = functools.partial(_spectral_mul_kernel, in_dim)
    # f is the outer grid axis so the (in_dim,out_dim,tf) weight blocks stay
    # resident across the inner batch steps (no re-DMA).
    grid = (f_pad // tf, b_pad // tb)

    o_re, o_im = pl.pallas_call(
        kernel,
        out_shape=(
            jax.ShapeDtypeStruct((b_pad, out_dim, f_pad), jnp.float32),
            jax.ShapeDtypeStruct((b_pad, out_dim, f_pad), jnp.float32),
        ),
        grid=grid,
        in_specs=[
            pl.BlockSpec((in_dim, tb, tf), lambda f, b: (0, b, f)),
            pl.BlockSpec((in_dim, tb, tf), lambda f, b: (0, b, f)),
            pl.BlockSpec((in_dim, out_dim, tf), lambda f, b: (0, 0, f)),
            pl.BlockSpec((in_dim, out_dim, tf), lambda f, b: (0, 0, f)),
        ],
        out_specs=(
            pl.BlockSpec((tb, out_dim, tf), lambda f, b: (b, 0, f)),
            pl.BlockSpec((tb, out_dim, tf), lambda f, b: (b, 0, f)),
        ),
        compiler_params=pltpu.CompilerParams(
            dimension_semantics=("parallel", "parallel"),
            vmem_limit_bytes=32 * 1024 * 1024,
        ),
    )(a_re, a_im, w_re, w_im)
    return o_re[:B, :, :F], o_im[:B, :, :F]


# ------------------------------------ forward --------------------------------------

def spectral_conv2d_forward(x, params, *, modes, norm="ortho",
                            block_m=512, block_f=512, block_b=8):
    """x: (B, n, n, in_dim) float32 -> (B, n, n, out_dim) float32."""
    B, n, n2, in_dim = x.shape
    assert n == n2
    out_dim = params["w_lin"].shape[1]

    # TODO(synk): dropout omitted (treated as eval-mode identity).

    xc = jnp.transpose(x, (0, 3, 1, 2))                  # (B, in_dim, n, n)
    # TODO(synk): rfft2/irfft2 have no clean Pallas equivalent; jnp.fft is used.
    x_ft = jnp.fft.rfft2(xc, s=(n, n), norm=norm)        # (B, in_dim, n, n//2+1) c64

    # gather the two retained corner blocks, stacked along the kx axis
    a = jnp.concatenate(
        [x_ft[:, :, :modes, :modes], x_ft[:, :, -modes:, :modes]], axis=2)
    Fdim = 2 * modes * modes
    # leading in_dim axis so the kernel does contiguous per-i ref loads
    a_re = jnp.real(a).astype(jnp.float32).reshape(B, in_dim, Fdim).transpose(1, 0, 2)
    a_im = jnp.imag(a).astype(jnp.float32).reshape(B, in_dim, Fdim).transpose(1, 0, 2)

    w0, w1 = params["fourier_weight"]                    # (in,out,modes,modes,2)
    w_cat = jnp.concatenate([w0, w1], axis=2)            # (in,out,2*modes,modes,2)
    w_re = w_cat[..., 0].reshape(in_dim, out_dim, Fdim).astype(jnp.float32)
    w_im = w_cat[..., 1].reshape(in_dim, out_dim, Fdim).astype(jnp.float32)

    o_re, o_im = spectral_mul(a_re, a_im, w_re, w_im,
                              block_f=block_f, block_b=block_b)
    o = jax.lax.complex(o_re, o_im).reshape(B, out_dim, 2 * modes, modes)

    out_ft = jnp.zeros((B, out_dim, n, n // 2 + 1), dtype=jnp.complex64)
    out_ft = out_ft.at[:, :, :modes, :modes].set(o[:, :, :modes, :])
    out_ft = out_ft.at[:, :, n - modes:, :modes].set(o[:, :, modes:, :])

    xs = jnp.fft.irfft2(out_ft, s=(n, n), norm=norm)     # (B, out_dim, n, n) f32
    xs = jnp.transpose(xs, (0, 2, 3, 1))                 # (B, n, n, out_dim)

    # fused residual Linear + add + SiLU (one HBM pass over the big arrays)
    y = residual_silu(
        x.reshape(B * n * n, in_dim).astype(jnp.float32),
        xs.reshape(B * n * n, out_dim).astype(jnp.float32),
        params["w_lin"], params["b_lin"], block_m=block_m)
    return y.reshape(B, n, n, out_dim)


# --------------------------------- reference (jnp) ----------------------------------

def _reference_forward(x, params, *, modes, norm="ortho"):
    B, n, _, in_dim = x.shape
    w_lin, b_lin = params["w_lin"], params["b_lin"]
    out_dim = w_lin.shape[1]
    res = x @ w_lin + b_lin[0]
    xc = jnp.transpose(x, (0, 3, 1, 2))
    x_ft = jnp.fft.rfft2(xc, s=(n, n), norm=norm)
    w0, w1 = params["fourier_weight"]

    def cmul(a, w):
        wr, wi = w[..., 0], w[..., 1]
        ar, ai = jnp.real(a), jnp.imag(a)
        outr = (jnp.einsum("bixy,ioxy->boxy", ar, wr)
                - jnp.einsum("bixy,ioxy->boxy", ai, wi))
        outi = (jnp.einsum("bixy,ioxy->boxy", ai, wr)
                + jnp.einsum("bixy,ioxy->boxy", ar, wi))
        return jax.lax.complex(outr, outi)

    out_ft = jnp.zeros((B, out_dim, n, n // 2 + 1), jnp.complex64)
    out_ft = out_ft.at[:, :, :modes, :modes].set(cmul(x_ft[:, :, :modes, :modes], w0))
    out_ft = out_ft.at[:, :, n - modes:, :modes].set(cmul(x_ft[:, :, -modes:, :modes], w1))
    xs = jnp.fft.irfft2(out_ft, s=(n, n), norm=norm)
    xs = jnp.transpose(xs, (0, 2, 3, 1))
    s = xs + res
    return s * jax.nn.sigmoid(s)


# -------------------------------------- main ----------------------------------------

if __name__ == "__main__":
    key = jax.random.PRNGKey(0)
    B, n, in_dim, out_dim, modes = 2, 16, 4, 4, 4
    k1, k2, k3, k4, k5 = jax.random.split(key, 5)

    x = jax.random.normal(k1, (B, n, n, in_dim), jnp.float32)

    # nn.Linear default init (uniform(-1/sqrt(fan_in), 1/sqrt(fan_in)))
    bound = 1.0 / (in_dim ** 0.5)
    w_lin = jax.random.uniform(k2, (in_dim, out_dim), jnp.float32, -bound, bound)
    b_lin = jax.random.uniform(k3, (1, out_dim), jnp.float32, -bound, bound)

    # xavier_normal_ with gain = 1/(in_dim*out_dim) * sqrt(in_dim+out_dim)
    gain = (1.0 / (in_dim * out_dim)) * ((in_dim + out_dim) ** 0.5)
    fan_in = out_dim * modes * modes * 2
    fan_out = in_dim * modes * modes * 2
    std = gain * (2.0 / (fan_in + fan_out)) ** 0.5
    w0 = std * jax.random.normal(k4, (in_dim, out_dim, modes, modes, 2), jnp.float32)
    w1 = std * jax.random.normal(k5, (in_dim, out_dim, modes, modes, 2), jnp.float32)

    params = {"w_lin": w_lin, "b_lin": b_lin, "fourier_weight": (w0, w1)}

    # small tiles at the toy size so the M grid actually has >1 step
    fwd = jax.jit(functools.partial(
        spectral_conv2d_forward, modes=modes, norm="ortho",
        block_m=128, block_f=128, block_b=8))
    y = fwd(x, params)
    jax.block_until_ready(y)
    assert y.shape == (B, n, n, out_dim)

    y_ref = _reference_forward(x, params, modes=modes, norm="ortho")
    assert jnp.allclose(y, y_ref, atol=1e-4, rtol=1e-4), \
        float(jnp.max(jnp.abs(y - y_ref)))
    print("KERNEL_OK")
</pallas_src>

<mosaic_0001>
module attributes {stable_mosaic.version = 11 : i64} {
  func.func @_spectral_mul_kernel(%arg0: i32, %arg1: i32, %arg2: memref<4x2x128xf32, #tpu.memory_space<vmem>>, %arg3: memref<4x2x128xf32, #tpu.memory_space<vmem>>, %arg4: memref<4x4x128xf32, #tpu.memory_space<vmem>>, %arg5: memref<4x4x128xf32, #tpu.memory_space<vmem>>, %arg6: memref<2x4x128xf32, #tpu.memory_space<vmem>>, %arg7: memref<2x4x128xf32, #tpu.memory_space<vmem>>) attributes {dimension_semantics = [#tpu.dimension_semantics<parallel>, #tpu.dimension_semantics<parallel>], iteration_bounds = array<i64: 1, 1>, scalar_prefetch = 0 : i64, scratch_operands = 0 : i64, tpu.core_type = #tpu.core_type<tc>, window_params = [{transform_indices = @transform_0, window_bounds = array<i64: 4, 2, 128>}, {transform_indices = @transform_1, window_bounds = array<i64: 4, 2, 128>}, {transform_indices = @transform_2, window_bounds = array<i64: 4, 4, 128>}, {transform_indices = @transform_3, window_bounds = array<i64: 4, 4, 128>}, {transform_indices = @transform_4, window_bounds = array<i64: 2, 4, 128>}, {transform_indices = @transform_5, window_bounds = array<i64: 2, 4, 128>}]} {
    %cst = arith.constant 0.000000e+00 : f32
    %0 = vector.broadcast %cst : f32 to vector<2x4x128xf32>
    %cst_0 = arith.constant 0.000000e+00 : f32
    %1 = vector.broadcast %cst_0 : f32 to vector<2x4x128xf32>
    %c0 = arith.constant 0 : index
    %c0_1 = arith.constant 0 : index
    %c0_2 = arith.constant 0 : index
    %2 = vector.load %arg2[%c0, %c0_1, %c0_2] : memref<4x2x128xf32, #tpu.memory_space<vmem>>, vector<1x2x128xf32>
    %3 = vector.shape_cast %2 : vector<1x2x128xf32> to vector<2x128xf32>
    %c0_3 = arith.constant 0 : index
    %c0_4 = arith.constant 0 : index
    %c0_5 = arith.constant 0 : index
    %4 = vector.load %arg3[%c0_3, %c0_4, %c0_5] : memref<4x2x128xf32, #tpu.memory_space<vmem>>, vector<1x2x128xf32>
    %5 = vector.shape_cast %4 : vector<1x2x128xf32> to vector<2x128xf32>
    %c0_6 = arith.constant 0 : index
    %c0_7 = arith.constant 0 : index
    %c0_8 = arith.constant 0 : index
    %6 = vector.load %arg4[%c0_6, %c0_7, %c0_8] : memref<4x4x128xf32, #tpu.memory_space<vmem>>, vector<1x4x128xf32>
    %7 = vector.shape_cast %6 : vector<1x4x128xf32> to vector<4x128xf32>
    %c0_9 = arith.constant 0 : index
    %c0_10 = arith.constant 0 : index
    %c0_11 = arith.constant 0 : index
    %8 = vector.load %arg5[%c0_9, %c0_10, %c0_11] : memref<4x4x128xf32, #tpu.memory_space<vmem>>, vector<1x4x128xf32>
    %9 = vector.shape_cast %8 : vector<1x4x128xf32> to vector<4x128xf32>
    %10 = vector.shape_cast %3 : vector<2x128xf32> to vector<2x1x128xf32>
    %11 = vector.shape_cast %5 : vector<2x128xf32> to vector<2x1x128xf32>
    %12 = vector.shape_cast %7 : vector<4x128xf32> to vector<1x4x128xf32>
    %13 = vector.shape_cast %9 : vector<4x128xf32> to vector<1x4x128xf32>
    %14 = vector.broadcast %10 : vector<2x1x128xf32> to vector<2x4x128xf32>
    %15 = vector.broadcast %12 : vector<1x4x128xf32> to vector<2x4x128xf32>
    %16 = arith.mulf %14, %15 : vector<2x4x128xf32>
    %17 = arith.addf %0, %16 : vector<2x4x128xf32>
    %18 = vector.broadcast %11 : vector<2x1x128xf32> to vector<2x4x128xf32>
    %19 = vector.broadcast %13 : vector<1x4x128xf32> to vector<2x4x128xf32>
    %20 = arith.mulf %18, %19 : vector<2x4x128xf32>
    %21 = arith.subf %17, %20 : vector<2x4x128xf32>
    %22 = vector.broadcast %11 : vector<2x1x128xf32> to vector<2x4x128xf32>
    %23 = vector.broadcast %12 : vector<1x4x128xf32> to vector<2x4x128xf32>
    %24 = arith.mulf %22, %23 : vector<2x4x128xf32>
    %25 = arith.addf %1, %24 : vector<2x4x128xf32>
    %26 = vector.broadcast %10 : vector<2x1x128xf32> to vector<2x4x128xf32>
    %27 = vector.broadcast %13 : vector<1x4x128xf32> to vector<2x4x128xf32>
    %28 = arith.mulf %26, %27 : vector<2x4x128xf32>
    %29 = arith.addf %25, %28 : vector<2x4x128xf32>
    %c1 = arith.constant 1 : index
    %c0_12 = arith.constant 0 : index
    %c0_13 = arith.constant 0 : index
    %30 = vector.load %arg2[%c1, %c0_12, %c0_13] : memref<4x2x128xf32, #tpu.memory_space<vmem>>, vector<1x2x128xf32>
    %31 = vector.shape_cast %30 : vector<1x2x128xf32> to vector<2x128xf32>
    %c1_14 = arith.constant 1 : index
    %c0_15 = arith.constant 0 : index
    %c0_16 = arith.constant 0 : index
    %32 = vector.load %arg3[%c1_14, %c0_15, %c0_16] : memref<4x2x128xf32, #tpu.memory_space<vmem>>, vector<1x2x128xf32>
    %33 = vector.shape_cast %32 : vector<1x2x128xf32> to vector<2x128xf32>
    %c1_17 = arith.constant 1 : index
    %c0_18 = arith.constant 0 : index
    %c0_19 = arith.constant 0 : index
    %34 = vector.load %arg4[%c1_17, %c0_18, %c0_19] : memref<4x4x128xf32, #tpu.memory_space<vmem>>, vector<1x4x128xf32>
    %35 = vector.shape_cast %34 : vector<1x4x128xf32> to vector<4x128xf32>
    %c1_20 = arith.constant 1 : index
    %c0_21 = arith.constant 0 : index
    %c0_22 = arith.constant 0 : index
    %36 = vector.load %arg5[%c1_20, %c0_21, %c0_22] : memref<4x4x128xf32, #tpu.memory_space<vmem>>, vector<1x4x128xf32>
    %37 = vector.shape_cast %36 : vector<1x4x128xf32> to vector<4x128xf32>
    %38 = vector.shape_cast %31 : vector<2x128xf32> to vector<2x1x128xf32>
    %39 = vector.shape_cast %33 : vector<2x128xf32> to vector<2x1x128xf32>
    %40 = vector.shape_cast %35 : vector<4x128xf32> to vector<1x4x128xf32>
    %41 = vector.shape_cast %37 : vector<4x128xf32> to vector<1x4x128xf32>
    %42 = vector.broadcast %38 : vector<2x1x128xf32> to vector<2x4x128xf32>
    %43 = vector.broadcast %40 : vector<1x4x128xf32> to vector<2x4x128xf32>
    %44 = arith.mulf %42, %43 : vector<2x4x128xf32>
    %45 = arith.addf %21, %44 : vector<2x4x128xf32>
    %46 = vector.broadcast %39 : vector<2x1x128xf32> to vector<2x4x128xf32>
    %47 = vector.broadcast %41 : vector<1x4x128xf32> to vector<2x4x128xf32>
    %48 = arith.mulf %46, %47 : vector<2x4x128xf32>
    %49 = arith.subf %45, %48 : vector<2x4x128xf32>
    %50 = vector.broadcast %39 : vector<2x1x128xf32> to vector<2x4x128xf32>
    %51 = vector.broadcast %40 : vector<1x4x128xf32> to vector<2x4x128xf32>
    %52 = arith.mulf %50, %51 : vector<2x4x128xf32>
    %53 = arith.addf %29, %52 : vector<2x4x128xf32>
    %54 = vector.broadcast %38 : vector<2x1x128xf32> to vector<2x4x128xf32>
    %55 = vector.broadcast %41 : vector<1x4x128xf32> to vector<2x4x128xf32>
    %56 = arith.mulf %54, %55 : vector<2x4x128xf32>
    %57 = arith.addf %53, %56 : vector<2x4x128xf32>
    %c2 = arith.constant 2 : index
    %c0_23 = arith.constant 0 : index
    %c0_24 = arith.constant 0 : index
    %58 = vector.load %arg2[%c2, %c0_23, %c0_24] : memref<4x2x128xf32, #tpu.memory_space<vmem>>, vector<1x2x128xf32>
    %59 = vector.shape_cast %58 : vector<1x2x128xf32> to vector<2x128xf32>
    %c2_25 = arith.constant 2 : index
    %c0_26 = arith.constant 0 : index
    %c0_27 = arith.constant 0 : index
    %60 = vector.load %arg3[%c2_25, %c0_26, %c0_27] : memref<4x2x128xf32, #tpu.memory_space<vmem>>, vector<1x2x128xf32>
    %61 = vector.shape_cast %60 : vector<1x2x128xf32> to vector<2x128xf32>
    %c2_28 = arith.constant 2 : index
    %c0_29 = arith.constant 0 : index
    %c0_30 = arith.constant 0 : index
    %62 = vector.load %arg4[%c2_28, %c0_29, %c0_30] : memref<4x4x128xf32, #tpu.memory_space<vmem>>, vector<1x4x128xf32>
    %63 = vector.shape_cast %62 : vector<1x4x128xf32> to vector<4x128xf32>
    %c2_31 = arith.constant 2 : index
    %c0_32 = arith.constant 0 : index
    %c0_33 = arith.constant 0 : index
    %64 = vector.load %arg5[%c2_31, %c0_32, %c0_33] : memref<4x4x128xf32, #tpu.memory_space<vmem>>, vector<1x4x128xf32>
    %65 = vector.shape_cast %64 : vector<1x4x128xf32> to vector<4x128xf32>
    %66 = vector.shape_cast %59 : vector<2x128xf32> to vector<2x1x128xf32>
    %67 = vector.shape_cast %61 : vector<2x128xf32> to vector<2x1x128xf32>
    %68 = vector.shape_cast %63 : vector<4x128xf32> to vector<1x4x128xf32>
    %69 = vector.shape_cast %65 : vector<4x128xf32> to vector<1x4x128xf32>
    %70 = vector.broadcast %66 : vector<2x1x128xf32> to vector<2x4x128xf32>
    %71 = vector.broadcast %68 : vector<1x4x128xf32> to vector<2x4x128xf32>
    %72 = arith.mulf %70, %71 : vector<2x4x128xf32>
    %73 = arith.addf %49, %72 : vector<2x4x128xf32>
    %74 = vector.broadcast %67 : vector<2x1x128xf32> to vector<2x4x128xf32>
    %75 = vector.broadcast %69 : vector<1x4x128xf32> to vector<2x4x128xf32>
    %76 = arith.mulf %74, %75 : vector<2x4x128xf32>
    %77 = arith.subf %73, %76 : vector<2x4x128xf32>
    %78 = vector.broadcast %67 : vector<2x1x128xf32> to vector<2x4x128xf32>
    %79 = vector.broadcast %68 : vector<1x4x128xf32> to vector<2x4x128xf32>
    %80 = arith.mulf %78, %79 : vector<2x4x128xf32>
    %81 = arith.addf %57, %80 : vector<2x4x128xf32>
    %82 = vector.broadcast %66 : vector<2x1x128xf32> to vector<2x4x128xf32>
    %83 = vector.broadcast %69 : vector<1x4x128xf32> to vector<2x4x128xf32>
    %84 = arith.mulf %82, %83 : vector<2x4x128xf32>
    %85 = arith.addf %81, %84 : vector<2x4x128xf32>
    %c3 = arith.constant 3 : index
    %c0_34 = arith.constant 0 : index
    %c0_35 = arith.constant 0 : index
    %86 = vector.load %arg2[%c3, %c0_34, %c0_35] : memref<4x2x128xf32, #tpu.memory_space<vmem>>, vector<1x2x128xf32>
    %87 = vector.shape_cast %86 : vector<1x2x128xf32> to vector<2x128xf32>
    %c3_36 = arith.constant 3 : index
    %c0_37 = arith.constant 0 : index
    %c0_38 = arith.constant 0 : index
    %88 = vector.load %arg3[%c3_36, %c0_37, %c0_38] : memref<4x2x128xf32, #tpu.memory_space<vmem>>, vector<1x2x128xf32>
    %89 = vector.shape_cast %88 : vector<1x2x128xf32> to vector<2x128xf32>
    %c3_39 = arith.constant 3 : index
    %c0_40 = arith.constant 0 : index
    %c0_41 = arith.constant 0 : index
    %90 = vector.load %arg4[%c3_39, %c0_40, %c0_41] : memref<4x4x128xf32, #tpu.memory_space<vmem>>, vector<1x4x128xf32>
    %91 = vector.shape_cast %90 : vector<1x4x128xf32> to vector<4x128xf32>
    %c3_42 = arith.constant 3 : index
    %c0_43 = arith.constant 0 : index
    %c0_44 = arith.constant 0 : index
    %92 = vector.load %arg5[%c3_42, %c0_43, %c0_44] : memref<4x4x128xf32, #tpu.memory_space<vmem>>, vector<1x4x128xf32>
    %93 = vector.shape_cast %92 : vector<1x4x128xf32> to vector<4x128xf32>
    %94 = vector.shape_cast %87 : vector<2x128xf32> to vector<2x1x128xf32>
    %95 = vector.shape_cast %89 : vector<2x128xf32> to vector<2x1x128xf32>
    %96 = vector.shape_cast %91 : vector<4x128xf32> to vector<1x4x128xf32>
    %97 = vector.shape_cast %93 : vector<4x128xf32> to vector<1x4x128xf32>
    %98 = vector.broadcast %94 : vector<2x1x128xf32> to vector<2x4x128xf32>
    %99 = vector.broadcast %96 : vector<1x4x128xf32> to vector<2x4x128xf32>
    %100 = arith.mulf %98, %99 : vector<2x4x128xf32>
    %101 = arith.addf %77, %100 : vector<2x4x128xf32>
    %102 = vector.broadcast %95 : vector<2x1x128xf32> to vector<2x4x128xf32>
    %103 = vector.broadcast %97 : vector<1x4x128xf32> to vector<2x4x128xf32>
    %104 = arith.mulf %102, %103 : vector<2x4x128xf32>
    %105 = arith.subf %101, %104 : vector<2x4x128xf32>
    %106 = vector.broadcast %95 : vector<2x1x128xf32> to vector<2x4x128xf32>
    %107 = vector.broadcast %96 : vector<1x4x128xf32> to vector<2x4x128xf32>
    %108 = arith.mulf %106, %107 : vector<2x4x128xf32>
    %109 = arith.addf %85, %108 : vector<2x4x128xf32>
    %110 = vector.broadcast %94 : vector<2x1x128xf32> to vector<2x4x128xf32>
    %111 = vector.broadcast %97 : vector<1x4x128xf32> to vector<2x4x128xf32>
    %112 = arith.mulf %110, %111 : vector<2x4x128xf32>
    %113 = arith.addf %109, %112 : vector<2x4x128xf32>
    %c0_45 = arith.constant 0 : index
    %c0_46 = arith.constant 0 : index
    %c0_47 = arith.constant 0 : index
    %114 = vector.load %arg6[%c0_45, %c0_46, %c0_47] : memref<2x4x128xf32, #tpu.memory_space<vmem>>, vector<2x4x128xf32>
    tpu.vector_store %arg6[%c0_45, %c0_46, %c0_47], %105 {strides = array<i32>} : memref<2x4x128xf32, #tpu.memory_space<vmem>>, vector<2x4x128xf32>,
    %c0_48 = arith.constant 0 : index
    %c0_49 = arith.constant 0 : index
    %c0_50 = arith.constant 0 : index
    %115 = vector.load %arg7[%c0_48, %c0_49, %c0_50] : memref<2x4x128xf32, #tpu.memory_space<vmem>>, vector<2x4x128xf32>
    tpu.vector_store %arg7[%c0_48, %c0_49, %c0_50], %113 {strides = array<i32>} : memref<2x4x128xf32, #tpu.memory_space<vmem>>, vector<2x4x128xf32>,
    return
  }
  func.func @transform_0(%arg0: i32, %arg1: i32) -> (i32, i32, i32) {
    %c0_i32 = arith.constant 0 : i32
    %c0_i32_0 = arith.constant 0 : i32
    return %c0_i32, %arg1, %arg0 : i32, i32, i32
  }
  func.func @transform_1(%arg0: i32, %arg1: i32) -> (i32, i32, i32) {
    %c0_i32 = arith.constant 0 : i32
    %c0_i32_0 = arith.constant 0 : i32
    return %c0_i32, %arg1, %arg0 : i32, i32, i32
  }
  func.func @transform_2(%arg0: i32, %arg1: i32) -> (i32, i32, i32) {
    %c0_i32 = arith.constant 0 : i32
    %c0_i32_0 = arith.constant 0 : i32
    %c0_i32_1 = arith.constant 0 : i32
    return %c0_i32, %c0_i32_0, %arg0 : i32, i32, i32
  }
  func.func @transform_3(%arg0: i32, %arg1: i32) -> (i32, i32, i32) {
    %c0_i32 = arith.constant 0 : i32
    %c0_i32_0 = arith.constant 0 : i32
    %c0_i32_1 = arith.constant 0 : i32
    return %c0_i32, %c0_i32_0, %arg0 : i32, i32, i32
  }
  func.func @transform_4(%arg0: i32, %arg1: i32) -> (i32, i32, i32) {
    %c0_i32 = arith.constant 0 : i32
    %c0_i32_0 = arith.constant 0 : i32
    return %arg1, %c0_i32, %arg0 : i32, i32, i32
  }
  func.func @transform_5(%arg0: i32, %arg1: i32) -> (i32, i32, i32) {
    %c0_i32 = arith.constant 0 : i32
    %c0_i32_0 = arith.constant 0 : i32
    return %arg1, %c0_i32, %arg0 : i32, i32, i32
  }
}

module attributes {stable_mosaic.version = 11 : i64} {
  func.func @_residual_silu_kernel(%arg0: i32, %arg1: memref<128x4xf32, #tpu.memory_space<vmem>>, %arg2: memref<128x4xf32, #tpu.memory_space<vmem>>, %arg3: memref<4x4xf32, #tpu.memory_space<vmem>>, %arg4: memref<1x4xf32, #tpu.memory_space<vmem>>, %arg5: memref<128x4xf32, #tpu.memory_space<vmem>>) attributes {dimension_semantics = [#tpu.dimension_semantics<parallel>], iteration_bounds = array<i64: 4>, scalar_prefetch = 0 : i64, scratch_operands = 0 : i64, tpu.core_type = #tpu.core_type<tc>, window_params = [{transform_indices = @transform_0, window_bounds = array<i64: 128, 4>}, {transform_indices = @transform_1, window_bounds = array<i64: 128, 4>}, {pipeline_mode = #tpu.pipeline_mode<synchronous>, transform_indices = @transform_2, window_bounds = array<i64: 4, 4>}, {pipeline_mode = #tpu.pipeline_mode<synchronous>, transform_indices = @transform_3, window_bounds = array<i64: 1, 4>}, {transform_indices = @transform_4, window_bounds = array<i64: 128, 4>}]} {
    %c0 = arith.constant 0 : index
    %c0_0 = arith.constant 0 : index
    %0 = vector.load %arg1[%c0, %c0_0] : memref<128x4xf32, #tpu.memory_space<vmem>>, vector<128x4xf32>
    %c0_1 = arith.constant 0 : index
    %c0_2 = arith.constant 0 : index
    %1 = vector.load %arg3[%c0_1, %c0_2] : memref<4x4xf32, #tpu.memory_space<vmem>>, vector<4x4xf32>
    %cst = arith.constant dense<0.000000e+00> : vector<128x4xf32>
    %2 = tpu.matmul %0, %1, %cst {dimension_numbers = #tpu.dot_dimension_numbers<[1], [0], [0], [1], [0, 0, 1, 1], [], []>} : vector<128x4xf32>, vector<4x4xf32>, vector<128x4xf32> -> vector<128x4xf32>
    %c0_3 = arith.constant 0 : index
    %c0_4 = arith.constant 0 : index
    %3 = vector.load %arg4[%c0_3, %c0_4] : memref<1x4xf32, #tpu.memory_space<vmem>>, vector<1x4xf32>
    %4 = vector.broadcast %3 : vector<1x4xf32> to vector<128x4xf32>
    %5 = arith.addf %2, %4 : vector<128x4xf32>
    %c0_5 = arith.constant 0 : index
    %c0_6 = arith.constant 0 : index
    %6 = vector.load %arg2[%c0_5, %c0_6] : memref<128x4xf32, #tpu.memory_space<vmem>>, vector<128x4xf32>
    %7 = arith.addf %6, %5 : vector<128x4xf32>
    %8 = arith.negf %7 : vector<128x4xf32>
    %9 = math.exp %8 : vector<128x4xf32>
    %cst_7 = arith.constant 1.000000e+00 : f32
    %10 = vector.broadcast %cst_7 : f32 to vector<128x4xf32>
    %11 = arith.addf %10, %9 : vector<128x4xf32>
    %12 = arith.divf %10, %11 : vector<128x4xf32>
    %13 = arith.mulf %7, %12 : vector<128x4xf32>
    %c0_8 = arith.constant 0 : index
    %c0_9 = arith.constant 0 : index
    %14 = vector.load %arg5[%c0_8, %c0_9] : memref<128x4xf32, #tpu.memory_space<vmem>>, vector<128x4xf32>
    tpu.vector_store %arg5[%c0_8, %c0_9], %13 {strides = array<i32>} : memref<128x4xf32, #tpu.memory_space<vmem>>, vector<128x4xf32>,
    return
  }
  func.func @transform_0(%arg0: i32) -> (i32, i32) {
    %c0_i32 = arith.constant 0 : i32
    %c0_i32_0 = arith.constant 0 : i32
    return %arg0, %c0_i32 : i32, i32
  }
  func.func @transform_1(%arg0: i32) -> (i32, i32) {
    %c0_i32 = arith.constant 0 : i32
    %c0_i32_0 = arith.constant 0 : i32
    return %arg0, %c0_i32 : i32, i32
  }
  func.func @transform_2(%arg0: i32) -> (i32, i32) {
    %c0_i32 = arith.constant 0 : i32
    %c0_i32_0 = arith.constant 0 : i32
    %c0_i32_1 = arith.constant 0 : i32
    return %c0_i32, %c0_i32_0 : i32, i32
  }
  func.func @transform_3(%arg0: i32) -> (i32, i32) {
    %c0_i32 = arith.constant 0 : i32
    %c0_i32_0 = arith.constant 0 : i32
    %c0_i32_1 = arith.constant 0 : i32
    return %c0_i32, %c0_i32_0 : i32, i32
  }
  func.func @transform_4(%arg0: i32) -> (i32, i32) {
    %c0_i32 = arith.constant 0 : i32
    %c0_i32_0 = arith.constant 0 : i32
    return %arg0, %c0_i32 : i32, i32
  }
}

</mosaic_0001>

<llo_original>
// kernel: squeeze.3
$region0: #{squeeze.3}
  %s0 = inlined_call_operand.vmem [shape: f32[4,4,8,4], index: 0, kind: input, shape index: {}]
  %s1 = inlined_call_operand.vmem [shape: f32[4,4,32], index: 1, kind: output, shape index: {}]
  $region1: #{squeeze.3} parent=0
    #allocation0 [shape = 'u8[16384]{0}', space=vmem, size = 0x4000, scoped, tag = 'scoped mem for output reshape']
    %v2 = vld [vmem:[%s0] ss:$8 sm:$0xf]
    %v3 = vld [vmem:[%s0] ss:$8 sm:$0xf0]
    %vm4 = vcmask 1047556
    %v5 = vsel %vm4, %v3, %v2
    %vm6 = vcmask 31744
    %7 = vst.msk [vmem:[#allocation0] sm:$0xf] %vm6, %v5
    %s8 = scalar_lea.vmem [#allocation0], 4
    %9 = vst.msk [vmem:[%s8] sm:$0xf0] %vm6, %v5
    %s10 = scalar_lea.vmem %s0, 64
    %v11 = vld [vmem:[%s10] ss:$8 sm:$0xf]
    %s12 = scalar_lea.vmem %s0, 64
    %v13 = vld [vmem:[%s12] ss:$8 sm:$0xf0]
    %vm14 = vcmask 1047556
    %v15 = vsel %vm14, %v13, %v11
    %vm16 = vcmask 31744
    %s17 = scalar_lea.vmem [#allocation0], 16
    %18 = vst.msk [vmem:[%s17] sm:$0xf] %vm16, %v15
    %s19 = scalar_lea.vmem [#allocation0], 20
    %20 = vst.msk [vmem:[%s19] sm:$0xf0] %vm16, %v15
    %s21 = scalar_lea.vmem %s0, 7
    %v22 = vld [vmem:[%s21] ss:$8 sm:$0xf]
    %s23 = scalar_lea.vmem %s0, 7
    %v24 = vld [vmem:[%s23] ss:$8 sm:$0xf0]
    %vm25 = vcmask 1047556
    %v26 = vsel %vm25, %v24, %v22
    %27 = vrot.lane.b32.xlu0 %v26, 28
    %v28 = vpop.permute.xlu0 %27
    %vm29 = vcmask 261344
    %30 = vst.msk [vmem:[#allocation0] sm:$0xf] %vm29, %v28
    %s31 = scalar_lea.vmem [#allocation0], 4
    %32 = vst.msk [vmem:[%s31] sm:$0xf0] %vm29, %v28
    %s33 = scalar_lea.vmem %s0, 71
    %v34 = vld [vmem:[%s33] ss:$8 sm:$0xf]
    %s35 = scalar_lea.vmem %s0, 71
    %v36 = vld [vmem:[%s35] ss:$8 sm:$0xf0]
    %vm37 = vcmask 1047556
    %v38 = vsel %vm37, %v36, %v34
    %39 = vrot.lane.b32.xlu0 %v38, 28
    %v40 = vpop.permute.xlu0 %39
    %vm41 = vcmask 261344
    %s42 = scalar_lea.vmem [#allocation0], 16
    %43 = vst.msk [vmem:[%s42] sm:$0xf] %vm41, %v40
    %s44 = scalar_lea.vmem [#allocation0], 20
    %45 = vst.msk [vmem:[%s44] sm:$0xf0] %vm41, %v40
    %s46 = scalar_lea.vmem %s0, 6
    %v47 = vld [vmem:[%s46] ss:$8 sm:$0xf]
    %s48 = scalar_lea.vmem %s0, 6
    %v49 = vld [vmem:[%s48] ss:$8 sm:$0xf0]
    %vm50 = vcmask 1047556
    %v51 = vsel %vm50, %v49, %v47
    %52 = vrot.lane.b32.xlu0 %v51, 24
    %v53 = vpop.permute.xlu0 %52
    %vm54 = vcmask 228544
    %55 = vst.msk [vmem:[#allocation0] sm:$0xf] %vm54, %v53
    %s56 = scalar_lea.vmem [#allocation0], 4
    %57 = vst.msk [vmem:[%s56] sm:$0xf0] %vm54, %v53
    %s58 = scalar_lea.vmem %s0, 70
    %v59 = vld [vmem:[%s58] ss:$8 sm:$0xf]
    %s60 = scalar_lea.vmem %s0, 70
    %v61 = vld [vmem:[%s60] ss:$8 sm:$0xf0]
    %vm62 = vcmask 1047556
    %v63 = vsel %vm62, %v61, %v59
    %64 = vrot.lane.b32.xlu0 %v63, 24
    %v65 = vpop.permute.xlu0 %64
    %vm66 = vcmask 228544
    %s67 = scalar_lea.vmem [#allocation0], 16
    %68 = vst.msk [vmem:[%s67] sm:$0xf] %vm66, %v65
    %s69 = scalar_lea.vmem [#allocation0], 20
    %70 = vst.msk [vmem:[%s69] sm:$0xf0] %vm66, %v65
    %s71 = scalar_lea.vmem %s0, 5
    %v72 = vld [vmem:[%s71] ss:$8 sm:$0xf]
    %s73 = scalar_lea.vmem %s0, 5
    %v74 = vld [vmem:[%s73] ss:$8 sm:$0xf0]
    %vm75 = vcmask 1047556
    %v76 = vsel %vm75, %v74, %v72
    %77 = vrot.lane.b32.xlu0 %v76, 20
    %v78 = vpop.permute.xlu0 %77
    %vm79 = vcmask 195744
    %80 = vst.msk [vmem:[#allocation0] sm:$0xf] %vm79, %v78
    %s81 = scalar_lea.vmem [#allocation0], 4
    %82 = vst.msk [vmem:[%s81] sm:$0xf0] %vm79, %v78
    %s83 = scalar_lea.vmem %s0, 69
    %v84 = vld [vmem:[%s83] ss:$8 sm:$0xf]
    %s85 = scalar_lea.vmem %s0, 69
    %v86 = vld [vmem:[%s85] ss:$8 sm:$0xf0]
    %vm87 = vcmask 1047556
    %v88 = vsel %vm87, %v86, %v84
    %89 = vrot.lane.b32.xlu0 %v88, 20
    %v90 = vpop.permute.xlu0 %89
    %vm91 = vcmask 195744
    %s92 = scalar_lea.vmem [#allocation0], 16
    %93 = vst.msk [vmem:[%s92] sm:$0xf] %vm91, %v90
    %s94 = scalar_lea.vmem [#allocation0], 20
    %95 = vst.msk [vmem:[%s94] sm:$0xf0] %vm91, %v90
    %s96 = scalar_lea.vmem %s0, 4
    %v97 = vld [vmem:[%s96] ss:$8 sm:$0xf]
    %s98 = scalar_lea.vmem %s0, 4
    %v99 = vld [vmem:[%s98] ss:$8 sm:$0xf0]
    %vm100 = vcmask 1047556
    %v101 = vsel %vm100, %v99, %v97
    %102 = vrot.lane.b32.xlu0 %v101, 16
    %v103 = vpop.permute.xlu0 %102
    %vm104 = vcmask 162944
    %105 = vst.msk [vmem:[#allocation0] sm:$0xf] %vm104, %v103
    %s106 = scalar_lea.vmem [#allocation0], 4
    %107 = vst.msk [vmem:[%s106] sm:$0xf0] %vm104, %v103
    %s108 = scalar_lea.vmem %s0, 68
    %v109 = vld [vmem:[%s108] ss:$8 sm:$0xf]
    %s110 = scalar_lea.vmem %s0, 68
    %v111 = vld [vmem:[%s110] ss:$8 sm:$0xf0]
    %vm112 = vcmask 1047556
    %v113 = vsel %vm112, %v111, %v109
    %114 = vrot.lane.b32.xlu0 %v113, 16
    %v115 = vpop.permute.xlu0 %114
    %vm116 = vcmask 162944
    %s117 = scalar_lea.vmem [#allocation0], 16
    %118 = vst.msk [vmem:[%s117] sm:$0xf] %vm116, %v115
    %s119 = scalar_lea.vmem [#allocation0], 20
    %120 = vst.msk [vmem:[%s119] sm:$0xf0] %vm116, %v115
    %s121 = scalar_lea.vmem %s0, 3
    %v122 = vld [vmem:[%s121] ss:$8 sm:$0xf]
    %s123 = scalar_lea.vmem %s0, 3
    %v124 = vld [vmem:[%s123] ss:$8 sm:$0xf0]
    %vm125 = vcmask 1047556
    %v126 = vsel %vm125, %v124, %v122
    %127 = vrot.lane.b32.xlu0 %v126, 12
    %v128 = vpop.permute.xlu0 %127
    %vm129 = vcmask 130144
    %130 = vst.msk [vmem:[#allocation0] sm:$0xf] %vm129, %v128
    %s131 = scalar_lea.vmem [#allocation0], 4
    %132 = vst.msk [vmem:[%s131] sm:$0xf0] %vm129, %v128
    %s133 = scalar_lea.vmem %s0, 67
    %v134 = vld [vmem:[%s133] ss:$8 sm:$0xf]
    %s135 = scalar_lea.vmem %s0, 67
    %v136 = vld [vmem:[%s135] ss:$8 sm:$0xf0]
    %vm137 = vcmask 1047556
    %v138 = vsel %vm137, %v136, %v134
    %139 = vrot.lane.b32.xlu0 %v138, 12
    %v140 = vpop.permute.xlu0 %139
    %vm141 = vcmask 130144
    %s142 = scalar_lea.vmem [#allocation0], 16
    %143 = vst.msk [vmem:[%s142] sm:$0xf] %vm141, %v140
    %s144 = scalar_lea.vmem [#allocation0], 20
    %145 = vst.msk [vmem:[%s144] sm:$0xf0] %vm141, %v140
    %s146 = scalar_lea.vmem %s0, 2
    %v147 = vld [vmem:[%s146] ss:$8 sm:$0xf]
    %s148 = scalar_lea.vmem %s0, 2
    %v149 = vld [vmem:[%s148] ss:$8 sm:$0xf0]
    %vm150 = vcmask 1047556
    %v151 = vsel %vm150, %v149, %v147
    %152 = vrot.lane.b32.xlu0 %v151, 8
    %v153 = vpop.permute.xlu0 %152
    %vm154 = vcmask 97344
    %155 = vst.msk [vmem:[#allocation0] sm:$0xf] %vm154, %v153
    %s156 = scalar_lea.vmem [#allocation0], 4
    %157 = vst.msk [vmem:[%s156] sm:$0xf0] %vm154, %v153
    %s158 = scalar_lea.vmem %s0, 66
    %v159 = vld [vmem:[%s158] ss:$8 sm:$0xf]
    %s160 = scalar_lea.vmem %s0, 66
    %v161 = vld [vmem:[%s160] ss:$8 sm:$0xf0]
    %vm162 = vcmask 1047556
    %v163 = vsel %vm162, %v161, %v159
    %164 = vrot.lane.b32.xlu0 %v163, 8
    %v165 = vpop.permute.xlu0 %164
    %vm166 = vcmask 97344
    %s167 = scalar_lea.vmem [#allocation0], 16
    %168 = vst.msk [vmem:[%s167] sm:$0xf] %vm166, %v165
    %s169 = scalar_lea.vmem [#allocation0], 20
    %170 = vst.msk [vmem:[%s169] sm:$0xf0] %vm166, %v165
    %s171 = scalar_lea.vmem %s0, 1
    %v172 = vld [vmem:[%s171] ss:$8 sm:$0xf]
    %s173 = scalar_lea.vmem %s0, 1
    %v174 = vld [vmem:[%s173] ss:$8 sm:$0xf0]
    %vm175 = vcmask 1047556
    %v176 = vsel %vm175, %v174, %v172
    %177 = vrot.lane.b32.xlu0 %v176, 4
    %v178 = vpop.permute.xlu0 %177
    %vm179 = vcmask 64544
    %180 = vst.msk [vmem:[#allocation0] sm:$0xf] %vm179, %v178
    %s181 = scalar_lea.vmem [#allocation0], 4
    %182 = vst.msk [vmem:[%s181] sm:$0xf0] %vm179, %v178
    %s183 = scalar_lea.vmem %s0, 65
    %v184 = vld [vmem:[%s183] ss:$8 sm:$0xf]
    %s185 = scalar_lea.vmem %s0, 65
    %v186 = vld [vmem:[%s185] ss:$8 sm:$0xf0]
    %vm187 = vcmask 1047556
    %v188 = vsel %vm187, %v186, %v184
    %189 = vrot.lane.b32.xlu0 %v188, 4
    %v190 = vpop.permute.xlu0 %189
    %vm191 = vcmask 64544
    %s192 = scalar_lea.vmem [#allocation0], 16
    %193 = vst.msk [vmem:[%s192] sm:$0xf] %vm191, %v190
    %s194 = scalar_lea.vmem [#allocation0], 20
    %195 = vst.msk [vmem:[%s194] sm:$0xf0] %vm191, %v190
    %s197 = sshllo.u32 0, 4
    %v199 = vld [vmem:[#allocation0] sm:%s197]
    %s200 = sshllo.u32 0, 4
    %201 = vst [vmem:[%s1] sm:%s200] %v199
    %s202 = scalar_lea.vmem [#allocation0], 8
    %v203 = vld [vmem:[%s202] sm:%s197]
    %s204 = sshllo.u32 0, 4
    %s205 = scalar_lea.vmem %s1, 4
    %206 = vst [vmem:[%s205] sm:%s204] %v203
    %s207 = scalar_lea.vmem [#allocation0], 16
    %v208 = vld [vmem:[%s207] sm:%s197]
    %s209 = sshllo.u32 0, 4
    %s210 = smul.addr 4, 2
    %s211 = scalar_lea.vmem %s1, %s210
    %212 = vst [vmem:[%s211] sm:%s209] %v208
    %s213 = scalar_lea.vmem [#allocation0], 24
    %v214 = vld [vmem:[%s213] sm:%s197]
    %s215 = sshllo.u32 0, 4
    %s216 = smul.addr 4, 3
    %s217 = scalar_lea.vmem %s1, %s216
    %218 = vst [vmem:[%s217] sm:%s215] %v214

// kernel: reverse.1
$region0: #{reverse.1}
  %s0 = inlined_call_operand.vmem [shape: f32[2,4,16,7], index: 0, kind: input, shape index: {}]
  %s1 = inlined_call_operand.vmem [shape: f32[2,4,16,7], index: 1, kind: output, shape index: {}]
  $region1: #{reverse.1} parent=0
    #allocation0 [shape = 'u8[65536]{0}', space=vmem, size = 0x10000, scoped, tag = 'operand span for operand 0']
    #allocation1 [shape = 'u8[32768]{0}', space=vmem, size = 0x8000, scoped, tag = 'operand span for operand 1']
    %s2 = scalar_lea.vmem [#allocation0], 8
    // Predicated region
    $region2: #{reverse.1} parent=1 // pred_check
      _
    $region3: #{reverse.1} parent=1 // pred_check_branch
      %4 = sbr.rel (0) target = $region5
    $region4: #{reverse.1} parent=1 // pred_region
      // Predicated region
      $region6: #{reverse.1} parent=4 // pred_check
        _
      $region7: #{reverse.1} parent=4 // pred_check_branch
        %6 = sbr.rel (0) target = $region9
      $region8: #{reverse.1} parent=4 // pred_region
        // Predicated region
        $region21: #{reverse.1} parent=8 // pred_check
          _
        $region22: #{reverse.1} parent=8 // pred_check_branch
          %35 = sbr.rel (0) target = $region24
        $region23: #{reverse.1} parent=8 // pred_region
          loop: start=0, step=1, limit=1
          $region25: #{reverse.1} parent=23 // loop_pre_header
            _
          $region26: #{reverse.1} parent=23 // loop_header
            %s37 = sphi 0, %s41
            %p38 = scmp.ge.s32.totalorder %s37, 1
            %s42 = sphi %s0, %s0
            %s43 = sphi %s2, %s2
          $region27: #{reverse.1} parent=23 // loop_header_branch
            %40 = sbr.rel (%p38) target = $region31
          $region28: #{reverse.1} parent=23 // loop_body
            %v44 = vld [vmem:[%s42] sm:$0xff]
            %45 = vst [vmem:[%s43] sm:$0xff] %v44
            %v46 = vld [vmem:[%s42 + $0x8] sm:$0xff]
            %47 = vst [vmem:[%s43 + $0x10] sm:$0xff] %v46
            %v48 = vld [vmem:[%s42 + $0x10] sm:$0xff]
            %49 = vst [vmem:[%s43 + $0x20] sm:$0xff] %v48
            %v50 = vld [vmem:[%s42 + $0x18] sm:$0xff]
            %51 = vst [vmem:[%s43 + $0x30] sm:$0xff] %v50
            %v52 = vld [vmem:[%s42 + $0x20] sm:$0xff]
            %53 = vst [vmem:[%s43 + $0x40] sm:$0xff] %v52
            %v54 = vld [vmem:[%s42 + $0x28] sm:$0xff]
            %55 = vst [vmem:[%s43 + $0x50] sm:$0xff] %v54
            %v56 = vld [vmem:[%s42 + $0x30] sm:$0xff]
            %57 = vst [vmem:[%s43 + $0x60] sm:$0xff] %v56
            %v58 = vld [vmem:[%s42 + $0x38] sm:$0xff]
            %59 = vst [vmem:[%s43 + $0x70] sm:$0xff] %v58
          $region29: #{reverse.1} parent=23 // loop_footer
            %s41 = sadd.s32 1, %s37
          $region30: #{reverse.1} parent=23 // loop_footer_branch
            %36 = sbr.rel target = $region26
          $region31: #{reverse.1} parent=23 // loop_exit
            _
        $region24: #{reverse.1} parent=8 // pred_fallthru
          _
        // Predicated region
        $region32: #{reverse.1} parent=8 // pred_check
          _
        $region33: #{reverse.1} parent=8 // pred_check_branch
          %61 = sbr.rel target = $region35
        $region34: #{reverse.1} parent=8 // pred_region
          _
        $region35: #{reverse.1} parent=8 // pred_fallthru
          _
      $region9: #{reverse.1} parent=4 // pred_fallthru
        _
      // Predicated region
      $region10: #{reverse.1} parent=4 // pred_check
        _
      $region11: #{reverse.1} parent=4 // pred_check_branch
        %8 = sbr.rel target = $region13
      $region12: #{reverse.1} parent=4 // pred_region
        loop: start=0, step=1, limit=1
        $region14: #{reverse.1} parent=12 // loop_pre_header
          _
        $region15: #{reverse.1} parent=12 // loop_header
          %s11 = sphi 0, %s15
          %p12 = scmp.ge.s32.totalorder %s11, 1
          %s16 = sphi %s0, %s0
          %s17 = sphi %s2, %s2
        $region16: #{reverse.1} parent=12 // loop_header_branch
          %14 = sbr.rel (%p12) target = $region20
        $region17: #{reverse.1} parent=12 // loop_body
          %v18 = vld [vmem:[%s16] sm:$0xff]
          %19 = vst [vmem:[%s17] sm:$0xff] %v18
          %v20 = vld [vmem:[%s16 + $0x8] sm:$0xff]
          %21 = vst [vmem:[%s17 + $0x10] sm:$0xff] %v20
          %v22 = vld [vmem:[%s16 + $0x10] sm:$0xff]
          %23 = vst [vmem:[%s17 + $0x20] sm:$0xff] %v22
          %v24 = vld [vmem:[%s16 + $0x18] sm:$0xff]
          %25 = vst [vmem:[%s17 + $0x30] sm:$0xff] %v24
          %v26 = vld [vmem:[%s16 + $0x20] sm:$0xff]
          %27 = vst [vmem:[%s17 + $0x40] sm:$0xff] %v26
          %v28 = vld [vmem:[%s16 + $0x28] sm:$0xff]
          %29 = vst [vmem:[%s17 + $0x50] sm:$0xff] %v28
          %v30 = vld [vmem:[%s16 + $0x30] sm:$0xff]
          %31 = vst [vmem:[%s17 + $0x60] sm:$0xff] %v30
          %v32 = vld [vmem:[%s16 + $0x38] sm:$0xff]
          %33 = vst [vmem:[%s17 + $0x70] sm:$0xff] %v32
        $region18: #{reverse.1} parent=12 // loop_footer
          %s15 = sadd.s32 1, %s11
        $region19: #{reverse.1} parent=12 // loop_footer_branch
          %10 = sbr.rel target = $region15
        $region20: #{reverse.1} parent=12 // loop_exit
          _
      $region13: #{reverse.1} parent=4 // pred_fallthru
        _
    $region5: #{reverse.1} parent=1 // pred_fallthru
      _
    %62 = vnop
    %s63 = scalar_lea.vmem [#allocation0], 7
    %v64 = vld [vmem:[%s63] ss:$-1 sm:$0xff]
    %v65 = vrot.slane %v64, 1
    %66 = vst [vmem:[#allocation1] sm:$0xff] %v65
    %s67 = scalar_lea.vmem [#allocation0], 8
    %s68 = scalar_lea.vmem %s67, 7 [#allocation0]
    %v69 = vld [vmem:[%s68] ss:$-1 sm:$0xff]
    %v70 = vrot.slane %v69, 1
    %v71 = vlaneseq
    %v72 = vshrl.u32 %v71, 7
    %vm73 = vcmp.lt.s32.totalorder %v72, 7
    %74 = vst.msk [vmem:[#allocation1] sm:$0xff] %vm73, %v70
    %s75 = scalar_lea.vmem [#allocation1], 8
    %s76 = scalar_lea.vmem [#allocation0], 16
    %s77 = scalar_lea.vmem %s76, 7 [#allocation0]
    %v78 = vld [vmem:[%s77] ss:$-1 sm:$0xff]
    %v79 = vrot.slane %v78, 1
    %80 = vst [vmem:[%s75] sm:$0xff] %v79
    %s81 = scalar_lea.vmem %s76, 8 [#allocation0]
    %s82 = scalar_lea.vmem %s81, 7 [#allocation0]
    %v83 = vld [vmem:[%s82] ss:$-1 sm:$0xff]
    %v84 = vrot.slane %v83, 1
    %v85 = vlaneseq
    %v86 = vshrl.u32 %v85, 7
    %vm87 = vcmp.lt.s32.totalorder %v86, 7
    %88 = vst.msk [vmem:[%s75] sm:$0xff] %vm87, %v84
    %s89 = scalar_lea.vmem [#allocation1], 16
    %s90 = scalar_lea.vmem [#allocation0], 32
    %s91 = scalar_lea.vmem %s90, 7 [#allocation0]
    %v92 = vld [vmem:[%s91] ss:$-1 sm:$0xff]
    %v93 = vrot.slane %v92, 1
    %94 = vst [vmem:[%s89] sm:$0xff] %v93
    %s95 = scalar_lea.vmem %s90, 8 [#allocation0]
    %s96 = scalar_lea.vmem %s95, 7 [#allocation0]
    %v97 = vld [vmem:[%s96] ss:$-1 sm:$0xff]
    %v98 = vrot.slane %v97, 1
    %v99 = vlaneseq
    %v100 = vshrl.u32 %v99, 7
    %vm101 = vcmp.lt.s32.totalorder %v100, 7
    %102 = vst.msk [vmem:[%s89] sm:$0xff] %vm101, %v98
    %s103 = scalar_lea.vmem [#allocation1], 24
    %s104 = scalar_lea.vmem [#allocation0], 48
    %s105 = scalar_lea.vmem %s104, 7 [#allocation0]
    %v106 = vld [vmem:[%s105] ss:$-1 sm:$0xff]
    %v107 = vrot.slane %v106, 1
    %108 = vst [vmem:[%s103] sm:$0xff] %v107
    %s109 = scalar_lea.vmem %s104, 8 [#allocation0]
    %s110 = scalar_lea.vmem %s109, 7 [#allocation0]
    %v111 = vld [vmem:[%s110] ss:$-1 sm:$0xff]
    %v112 = vrot.slane %v111, 1
    %v113 = vlaneseq
    %v114 = vshrl.u32 %v113, 7
    %vm115 = vcmp.lt.s32.totalorder %v114, 7
    %116 = vst.msk [vmem:[%s103] sm:$0xff] %vm115, %v112
    %s117 = scalar_lea.vmem [#allocation1], 32
    %s118 = scalar_lea.vmem [#allocation0], 64
    %s119 = scalar_lea.vmem %s118, 7 [#allocation0]
    %v120 = vld [vmem:[%s119] ss:$-1 sm:$0xff]
    %v121 = vrot.slane %v120, 1
    %122 = vst [vmem:[%s117] sm:$0xff] %v121
    %s123 = scalar_lea.vmem %s118, 8 [#allocation0]
    %s124 = scalar_lea.vmem %s123, 7 [#allocation0]
    %v125 = vld [vmem:[%s124] ss:$-1 sm:$0xff]
    %v126 = vrot.slane %v125, 1
    %v127 = vlaneseq
    %v128 = vshrl.u32 %v127, 7
    %vm129 = vcmp.lt.s32.totalorder %v128, 7
    %130 = vst.msk [vmem:[%s117] sm:$0xff] %vm129, %v126
    %s131 = scalar_lea.vmem [#allocation1], 40
    %s132 = scalar_lea.vmem [#allocation0], 80
    %s133 = scalar_lea.vmem %s132, 7 [#allocation0]
    %v134 = vld [vmem:[%s133] ss:$-1 sm:$0xff]
    %v135 = vrot.slane %v134, 1
    %136 = vst [vmem:[%s131] sm:$0xff] %v135
    %s137 = scalar_lea.vmem %s132, 8 [#allocation0]
    %s138 = scalar_lea.vmem %s137, 7 [#allocation0]
    %v139 = vld [vmem:[%s138] ss:$-1 sm:$0xff]
    %v140 = vrot.slane %v139, 1
    %v141 = vlaneseq
    %v142 = vshrl.u32 %v141, 7
    %vm143 = vcmp.lt.s32.totalorder %v142, 7
    %144 = vst.msk [vmem:[%s131] sm:$0xff] %vm143, %v140
    %s145 = scalar_lea.vmem [#allocation1], 48
    %s146 = scalar_lea.vmem [#allocation0], 96
    %s147 = scalar_lea.vmem %s146, 7 [#allocation0]
    %v148 = vld [vmem:[%s147] ss:$-1 sm:$0xff]
    %v149 = vrot.slane %v148, 1
    %150 = vst [vmem:[%s145] sm:$0xff] %v149
    %s151 = scalar_lea.vmem %s146, 8 [#allocation0]
    %s152 = scalar_lea.vmem %s151, 7 [#allocation0]
    %v153 = vld [vmem:[%s152] ss:$-1 sm:$0xff]
    %v154 = vrot.slane %v153, 1
    %v155 = vlaneseq
    %v156 = vshrl.u32 %v155, 7
    %vm157 = vcmp.lt.s32.totalorder %v156, 7
    %158 = vst.msk [vmem:[%s145] sm:$0xff] %vm157, %v154
    %s159 = scalar_lea.vmem [#allocation1], 56
    %s160 = scalar_lea.vmem [#allocation0], 112
    %s161 = scalar_lea.vmem %s160, 7 [#allocation0]
    %v162 = vld [vmem:[%s161] ss:$-1 sm:$0xff]
    %v163 = vrot.slane %v162, 1
    %164 = vst [vmem:[%s159] sm:$0xff] %v163
    %s165 = scalar_lea.vmem %s160, 8 [#allocation0]
    %s166 = scalar_lea.vmem %s165, 7 [#allocation0]
    %v167 = vld [vmem:[%s166] ss:$-1 sm:$0xff]
    %v168 = vrot.slane %v167, 1
    %v169 = vlaneseq
    %v170 = vshrl.u32 %v169, 7
    %vm171 = vcmp.lt.s32.totalorder %v170, 7
    %172 = vst.msk [vmem:[%s159] sm:$0xff] %vm171, %v168
    // Predicated region
    $region36: #{reverse.1} parent=1 // pred_check
      _
    $region37: #{reverse.1} parent=1 // pred_check_branch
      %174 = sbr.rel (0) target = $region39
    $region38: #{reverse.1} parent=1 // pred_region
      // Predicated region
      $region40: #{reverse.1} parent=38 // pred_check
        _
      $region41: #{reverse.1} parent=38 // pred_check_branch
        %176 = sbr.rel (0) target = $region43
      $region42: #{reverse.1} parent=38 // pred_region
        // Predicated region
        $region55: #{reverse.1} parent=42 // pred_check
          _
        $region56: #{reverse.1} parent=42 // pred_check_branch
          %205 = sbr.rel (0) target = $region58
        $region57: #{reverse.1} parent=42 // pred_region
          loop: start=0, step=1, limit=1
          $region59: #{reverse.1} parent=57 // loop_pre_header
            _
          $region60: #{reverse.1} parent=57 // loop_header
            %s207 = sphi 0, %s211
            %p208 = scmp.ge.s32.totalorder %s207, 1
            %s212 = sphi [#allocation1], [#allocation1]
            %s213 = sphi %s1, %s1
          $region61: #{reverse.1} parent=57 // loop_header_branch
            %210 = sbr.rel (%p208) target = $region65
          $region62: #{reverse.1} parent=57 // loop_body
            %v214 = vld [vmem:[%s212] sm:$0xff]
            %215 = vst [vmem:[%s213] sm:$0xff] %v214
            %v216 = vld [vmem:[%s212 + $0x8] sm:$0xff]
            %217 = vst [vmem:[%s213 + $0x8] sm:$0xff] %v216
            %v218 = vld [vmem:[%s212 + $0x10] sm:$0xff]
            %219 = vst [vmem:[%s213 + $0x10] sm:$0xff] %v218
            %v220 = vld [vmem:[%s212 + $0x18] sm:$0xff]
            %221 = vst [vmem:[%s213 + $0x18] sm:$0xff] %v220
            %v222 = vld [vmem:[%s212 + $0x20] sm:$0xff]
            %223 = vst [vmem:[%s213 + $0x20] sm:$0xff] %v222
            %v224 = vld [vmem:[%s212 + $0x28] sm:$0xff]
            %225 = vst [vmem:[%s213 + $0x28] sm:$0xff] %v224
            %v226 = vld [vmem:[%s212 + $0x30] sm:$0xff]
            %227 = vst [vmem:[%s213 + $0x30] sm:$0xff] %v226
            %v228 = vld [vmem:[%s212 + $0x38] sm:$0xff]
            %229 = vst [vmem:[%s213 + $0x38] sm:$0xff] %v228
          $region63: #{reverse.1} parent=57 // loop_footer
            %s211 = sadd.s32 1, %s207
          $region64: #{reverse.1} parent=57 // loop_footer_branch
            %206 = sbr.rel target = $region60
          $region65: #{reverse.1} parent=57 // loop_exit
            _
        $region58: #{reverse.1} parent=42 // pred_fallthru
          _
        // Predicated region
        $region66: #{reverse.1} parent=42 // pred_check
          _
        $region67: #{reverse.1} parent=42 // pred_check_branch
          %231 = sbr.rel target = $region69
        $region68: #{reverse.1} parent=42 // pred_region
          _
        $region69: #{reverse.1} parent=42 // pred_fallthru
          _
      $region43: #{reverse.1} parent=38 // pred_fallthru
        _
      // Predicated region
      $region44: #{reverse.1} parent=38 // pred_check
        _
      $region45: #{reverse.1} parent=38 // pred_check_branch
        %178 = sbr.rel target = $region47
      $region46: #{reverse.1} parent=38 // pred_region
        loop: start=0, step=1, limit=1
        $region48: #{reverse.1} parent=46 // loop_pre_header
          _
        $region49: #{reverse.1} parent=46 // loop_header
          %s181 = sphi 0, %s185
          %p182 = scmp.ge.s32.totalorder %s181, 1
          %s186 = sphi [#allocation1], [#allocation1]
          %s187 = sphi %s1, %s1
        $region50: #{reverse.1} parent=46 // loop_header_branch
          %184 = sbr.rel (%p182) target = $region54
        $region51: #{reverse.1} parent=46 // loop_body
          %v188 = vld [vmem:[%s186] sm:$0xff]
          %189 = vst [vmem:[%s187] sm:$0xff] %v188
          %v190 = vld [vmem:[%s186 + $0x8] sm:$0xff]
          %191 = vst [vmem:[%s187 + $0x8] sm:$0xff] %v190
          %v192 = vld [vmem:[%s186 + $0x10] sm:$0xff]
          %193 = vst [vmem:[%s187 + $0x10] sm:$0xff] %v192
          %v194 = vld [vmem:[%s186 + $0x18] sm:$0xff]
          %195 = vst [vmem:[%s187 + $0x18] sm:$0xff] %v194
          %v196 = vld [vmem:[%s186 + $0x20] sm:$0xff]
          %197 = vst [vmem:[%s187 + $0x20] sm:$0xff] %v196
          %v198 = vld [vmem:[%s186 + $0x28] sm:$0xff]
          %199 = vst [vmem:[%s187 + $0x28] sm:$0xff] %v198
          %v200 = vld [vmem:[%s186 + $0x30] sm:$0xff]
          %201 = vst [vmem:[%s187 + $0x30] sm:$0xff] %v200
          %v202 = vld [vmem:[%s186 + $0x38] sm:$0xff]
          %203 = vst [vmem:[%s187 + $0x38] sm:$0xff] %v202
        $region52: #{reverse.1} parent=46 // loop_footer
          %s185 = sadd.s32 1, %s181
        $region53: #{reverse.1} parent=46 // loop_footer_branch
          %180 = sbr.rel target = $region49
        $region54: #{reverse.1} parent=46 // loop_exit
          _
      $region47: #{reverse.1} parent=38 // pred_fallthru
        _
    $region39: #{reverse.1} parent=1 // pred_fallthru
      _
    %232 = vnop

// kernel: spectral_conv2d_forward.2
$region0: #{spectral_conv2d_forward.2}
  #allocation0 [shape = 'u32[]', space=smem, size = 0x4, offset = 0x4, fixed_abs, tag = 'smem constant byte address 0x4 - core index']
  #allocation1 [shape = 'u32[144,128]{1,0:T(1,128)}', space=vmem, size = 0x12000, scoped, tag = 'internal scratch']
  %s0 = inlined_call_operand.vmem [shape: f32[4,2,128], index: 0, kind: input, shape index: {}]
  %s1 = inlined_call_operand.vmem [shape: f32[4,2,128], index: 1, kind: input, shape index: {}]
  %s2 = inlined_call_operand.vmem [shape: f32[4,4,128], index: 2, kind: input, shape index: {}]
  %s3 = inlined_call_operand.vmem [shape: f32[4,4,128], index: 3, kind: input, shape index: {}]
  %s4 = inlined_call_operand.vmem [shape: f32[2,4,128], index: 4, kind: output, shape index: {0}]
  %s5 = inlined_call_operand.vmem [shape: f32[2,4,128], index: 5, kind: output, shape index: {1}]
  %6 = xla_tuple %s4, %s5
  %s7 = sld [smem:[#allocation0]]
  $region34: #{spectral_conv2d_forward.2} parent=0
    _
  %s9 = ssub.s32 1, %s7
  %s10 = scalar_select 0, %s9, %s7
  // Predicated region
  $region2: #{spectral_conv2d_forward.2} parent=0 // pred_check
    _
  $region3: #{spectral_conv2d_forward.2} parent=0 // pred_check_branch
    %12 = sbr.rel (0) target = $region5
  $region4: #{spectral_conv2d_forward.2} parent=0 // pred_region
    _
  $region5: #{spectral_conv2d_forward.2} parent=0 // pred_fallthru
    _
  // Predicated region
  $region6: #{spectral_conv2d_forward.2} parent=0 // pred_check
    _
  $region7: #{spectral_conv2d_forward.2} parent=0 // pred_check_branch
    %14 = sbr.rel (0) target = $region9
  $region8: #{spectral_conv2d_forward.2} parent=0 // pred_region
    _
  $region9: #{spectral_conv2d_forward.2} parent=0 // pred_fallthru
    _
  // Predicated region
  $region10: #{spectral_conv2d_forward.2} parent=0 // pred_check
    _
  $region11: #{spectral_conv2d_forward.2} parent=0 // pred_check_branch
    %16 = sbr.rel (0) target = $region13
  $region12: #{spectral_conv2d_forward.2} parent=0 // pred_region
    _
  $region13: #{spectral_conv2d_forward.2} parent=0 // pred_fallthru
    _
  // Predicated region
  $region14: #{spectral_conv2d_forward.2} parent=0 // pred_check
    _
  $region15: #{spectral_conv2d_forward.2} parent=0 // pred_check_branch
    %18 = sbr.rel (0) target = $region17
  $region16: #{spectral_conv2d_forward.2} parent=0 // pred_region
    _
  $region17: #{spectral_conv2d_forward.2} parent=0 // pred_fallthru
    _
  %v19 = vld [vmem:[%s0] sm:$0x3]
  %v20 = vld [vmem:[%s1] sm:$0x3]
  %v21 = vld [vmem:[%s2] sm:$0xf]
  %v22 = vld [vmem:[%s3] sm:$0xf]
  %v25 = vunpack.c.l.s4 1966171168
  %v26 = vunpack.c.0.s8 %v25
  %v27 = vlaneseq
  %v28 = vshrl.u32 %v27, 7
  %v29 = vsub.s32 %v26, %v28
  %v30 = vrot.slane %v19, %v29
  %v31 = vcombine.high %v30, %v30
  %v33 = vunpack.c.l.s4 1966171168
  %v34 = vunpack.c.0.s8 %v33
  %v35 = vlaneseq
  %v36 = vshrl.u32 %v35, 7
  %v37 = vsub.s32 %v34, %v36
  %v38 = vrot.slane %v30, %v37
  %v40 = vunpack.c.l.s4 1966171168
  %v41 = vunpack.c.0.s8 %v40
  %v42 = vlaneseq
  %v43 = vshrl.u32 %v42, 7
  %v44 = vsub.s32 %v41, %v43
  %v45 = vrot.slane %v31, %v44
  %v48 = vunpack.c.l.s4 1966171168
  %v49 = vunpack.c.0.s8 %v48
  %v50 = vlaneseq
  %v51 = vshrl.u32 %v50, 7
  %v52 = vsub.s32 %v49, %v51
  %v53 = vrot.slane %v20, %v52
  %v54 = vcombine.high %v53, %v53
  %v56 = vunpack.c.l.s4 1966171168
  %v57 = vunpack.c.0.s8 %v56
  %v58 = vlaneseq
  %v59 = vshrl.u32 %v58, 7
  %v60 = vsub.s32 %v57, %v59
  %v61 = vrot.slane %v53, %v60
  %v63 = vunpack.c.l.s4 1966171168
  %v64 = vunpack.c.0.s8 %v63
  %v65 = vlaneseq
  %v66 = vshrl.u32 %v65, 7
  %v67 = vsub.s32 %v64, %v66
  %v68 = vrot.slane %v54, %v67
  %v69 = vlaneseq
  %v70 = vshrl.u32 %v69, 7
  %v71 = vsub.s32 0, %v70
  %v72 = vrot.slane %v38, %v71
  %v73 = vlaneseq
  %v74 = vshrl.u32 %v73, 7
  %v75 = vsub.s32 0, %v74
  %v76 = vrot.slane %v45, %v75
  %v79 = vmul.f32 %v72, %v21
  %v80 = vmul.f32 %v76, %v21
  %v81 = vadd.f32 %v79, 0.0
  %v82 = vadd.f32 %v80, 0.0
  %v83 = vlaneseq
  %v84 = vshrl.u32 %v83, 7
  %v85 = vsub.s32 0, %v84
  %v86 = vrot.slane %v61, %v85
  %v87 = vlaneseq
  %v88 = vshrl.u32 %v87, 7
  %v89 = vsub.s32 0, %v88
  %v90 = vrot.slane %v68, %v89
  %v93 = vmul.f32 %v86, %v22
  %v94 = vmul.f32 %v90, %v22
  %v95 = vsub.f32 %v81, %v93
  %v96 = vsub.f32 %v82, %v94
  %v97 = vmul.f32 %v86, %v21
  %v98 = vmul.f32 %v90, %v21
  %v99 = vadd.f32 %v97, 0.0
  %v100 = vadd.f32 %v98, 0.0
  %v101 = vmul.f32 %v72, %v22
  %v102 = vmul.f32 %v76, %v22
  %v103 = vadd.f32 %v99, %v101
  %v104 = vadd.f32 %v100, %v102
  %s105 = scalar_lea.vmem %s0, 2
  %v106 = vld [vmem:[%s105] sm:$0x3]
  %s107 = scalar_lea.vmem %s1, 2
  %v108 = vld [vmem:[%s107] sm:$0x3]
  %s109 = scalar_lea.vmem %s2, 4
  %v110 = vld [vmem:[%s109] sm:$0xf]
  %s111 = scalar_lea.vmem %s3, 4
  %v112 = vld [vmem:[%s111] sm:$0xf]
  %v115 = vunpack.c.l.s4 1966171168
  %v116 = vunpack.c.0.s8 %v115
  %v117 = vlaneseq
  %v118 = vshrl.u32 %v117, 7
  %v119 = vsub.s32 %v116, %v118
  %v120 = vrot.slane %v106, %v119
  %v121 = vcombine.high %v120, %v120
  %v123 = vunpack.c.l.s4 1966171168
  %v124 = vunpack.c.0.s8 %v123
  %v125 = vlaneseq
  %v126 = vshrl.u32 %v125, 7
  %v127 = vsub.s32 %v124, %v126
  %v128 = vrot.slane %v120, %v127
  %v130 = vunpack.c.l.s4 1966171168
  %v131 = vunpack.c.0.s8 %v130
  %v132 = vlaneseq
  %v133 = vshrl.u32 %v132, 7
  %v134 = vsub.s32 %v131, %v133
  %v135 = vrot.slane %v121, %v134
  %v138 = vunpack.c.l.s4 1966171168
  %v139 = vunpack.c.0.s8 %v138
  %v140 = vlaneseq
  %v141 = vshrl.u32 %v140, 7
  %v142 = vsub.s32 %v139, %v141
  %v143 = vrot.slane %v108, %v142
  %v144 = vcombine.high %v143, %v143
  %v146 = vunpack.c.l.s4 1966171168
  %v147 = vunpack.c.0.s8 %v146
  %v148 = vlaneseq
  %v149 = vshrl.u32 %v148, 7
  %v150 = vsub.s32 %v147, %v149
  %v151 = vrot.slane %v143, %v150
  %v153 = vunpack.c.l.s4 1966171168
  %v154 = vunpack.c.0.s8 %v153
  %v155 = vlaneseq
  %v156 = vshrl.u32 %v155, 7
  %v157 = vsub.s32 %v154, %v156
  %v158 = vrot.slane %v144, %v157
  %v159 = vlaneseq
  %v160 = vshrl.u32 %v159, 7
  %v161 = vsub.s32 0, %v160
  %v162 = vrot.slane %v128, %v161
  %v163 = vlaneseq
  %v164 = vshrl.u32 %v163, 7
  %v165 = vsub.s32 0, %v164
  %v166 = vrot.slane %v135, %v165
  %v169 = vmul.f32 %v162, %v110
  %v170 = vmul.f32 %v166, %v110
  %v171 = vadd.f32 %v95, %v169
  %v172 = vadd.f32 %v96, %v170
  %v173 = vlaneseq
  %v174 = vshrl.u32 %v173, 7
  %v175 = vsub.s32 0, %v174
  %v176 = vrot.slane %v151, %v175
  %v177 = vlaneseq
  %v178 = vshrl.u32 %v177, 7
  %v179 = vsub.s32 0, %v178
  %v180 = vrot.slane %v158, %v179
  %v183 = vmul.f32 %v176, %v112
  %v184 = vmul.f32 %v180, %v112
  %v185 = vsub.f32 %v171, %v183
  %v186 = vsub.f32 %v172, %v184
  %v187 = vmul.f32 %v176, %v110
  %v188 = vmul.f32 %v180, %v110
  %v189 = vadd.f32 %v103, %v187
  %v190 = vadd.f32 %v104, %v188
  %v191 = vmul.f32 %v162, %v112
  %v192 = vmul.f32 %v166, %v112
  %v193 = vadd.f32 %v189, %v191
  %v194 = vadd.f32 %v190, %v192
  %s195 = scalar_lea.vmem %s0, 4
  %v196 = vld [vmem:[%s195] sm:$0x3]
  %s197 = scalar_lea.vmem %s1, 4
  %v198 = vld [vmem:[%s197] sm:$0x3]
  %s199 = scalar_lea.vmem %s2, 8
  %v200 = vld [vmem:[%s199] sm:$0xf]
  %s201 = scalar_lea.vmem %s3, 8
  %v202 = vld [vmem:[%s201] sm:$0xf]
  %v205 = vunpack.c.l.s4 1966171168
  %v206 = vunpack.c.0.s8 %v205
  %v207 = vlaneseq
  %v208 = vshrl.u32 %v207, 7
  %v209 = vsub.s32 %v206, %v208
  %v210 = vrot.slane %v196, %v209
  %v211 = vcombine.high %v210, %v210
  %v213 = vunpack.c.l.s4 1966171168
  %v214 = vunpack.c.0.s8 %v213
  %v215 = vlaneseq
  %v216 = vshrl.u32 %v215, 7
  %v217 = vsub.s32 %v214, %v216
  %v218 = vrot.slane %v210, %v217
  %v220 = vunpack.c.l.s4 1966171168
  %v221 = vunpack.c.0.s8 %v220
  %v222 = vlaneseq
  %v223 = vshrl.u32 %v222, 7
  %v224 = vsub.s32 %v221, %v223
  %v225 = vrot.slane %v211, %v224
  %v228 = vunpack.c.l.s4 1966171168
  %v229 = vunpack.c.0.s8 %v228
  %v230 = vlaneseq
  %v231 = vshrl.u32 %v230, 7
  %v232 = vsub.s32 %v229, %v231
  %v233 = vrot.slane %v198, %v232
  %v234 = vcombine.high %v233, %v233
  %v236 = vunpack.c.l.s4 1966171168
  %v237 = vunpack.c.0.s8 %v236
  %v238 = vlaneseq
  %v239 = vshrl.u32 %v238, 7
  %v240 = vsub.s32 %v237, %v239
  %v241 = vrot.slane %v233, %v240
  %v243 = vunpack.c.l.s4 1966171168
  %v244 = vunpack.c.0.s8 %v243
  %v245 = vlaneseq
  %v246 = vshrl.u32 %v245, 7
  %v247 = vsub.s32 %v244, %v246
  %v248 = vrot.slane %v234, %v247
  %v249 = vlaneseq
  %v250 = vshrl.u32 %v249, 7
  %v251 = vsub.s32 0, %v250
  %v252 = vrot.slane %v218, %v251
  %v253 = vlaneseq
  %v254 = vshrl.u32 %v253, 7
  %v255 = vsub.s32 0, %v254
  %v256 = vrot.slane %v225, %v255
  %v259 = vmul.f32 %v252, %v200
  %v260 = vmul.f32 %v256, %v200
  %v261 = vadd.f32 %v185, %v259
  %v262 = vadd.f32 %v186, %v260
  %v263 = vlaneseq
  %v264 = vshrl.u32 %v263, 7
  %v265 = vsub.s32 0, %v264
  %v266 = vrot.slane %v241, %v265
  %v267 = vlaneseq
  %v268 = vshrl.u32 %v267, 7
  %v269 = vsub.s32 0, %v268
  %v270 = vrot.slane %v248, %v269
  %v273 = vmul.f32 %v266, %v202
  %v274 = vmul.f32 %v270, %v202
  %v275 = vsub.f32 %v261, %v273
  %v276 = vsub.f32 %v262, %v274
  %v277 = vmul.f32 %v266, %v200
  %v278 = vmul.f32 %v270, %v200
  %v279 = vadd.f32 %v193, %v277
  %v280 = vadd.f32 %v194, %v278
  %v281 = vmul.f32 %v252, %v202
  %v282 = vmul.f32 %v256, %v202
  %v283 = vadd.f32 %v279, %v281
  %v284 = vadd.f32 %v280, %v282
  %s285 = scalar_lea.vmem %s0, 6
  %v286 = vld [vmem:[%s285] sm:$0x3]
  %s287 = scalar_lea.vmem %s1, 6
  %v288 = vld [vmem:[%s287] sm:$0x3]
  %s289 = scalar_lea.vmem %s2, 12
  %v290 = vld [vmem:[%s289] sm:$0xf]
  %s291 = scalar_lea.vmem %s3, 12
  %v292 = vld [vmem:[%s291] sm:$0xf]
  %v295 = vunpack.c.l.s4 1966171168
  %v296 = vunpack.c.0.s8 %v295
  %v297 = vlaneseq
  %v298 = vshrl.u32 %v297, 7
  %v299 = vsub.s32 %v296, %v298
  %v300 = vrot.slane %v286, %v299
  %v301 = vcombine.high %v300, %v300
  %v303 = vunpack.c.l.s4 1966171168
  %v304 = vunpack.c.0.s8 %v303
  %v305 = vlaneseq
  %v306 = vshrl.u32 %v305, 7
  %v307 = vsub.s32 %v304, %v306
  %v308 = vrot.slane %v300, %v307
  %v310 = vunpack.c.l.s4 1966171168
  %v311 = vunpack.c.0.s8 %v310
  %v312 = vlaneseq
  %v313 = vshrl.u32 %v312, 7
  %v314 = vsub.s32 %v311, %v313
  %v315 = vrot.slane %v301, %v314
  %v318 = vunpack.c.l.s4 1966171168
  %v319 = vunpack.c.0.s8 %v318
  %v320 = vlaneseq
  %v321 = vshrl.u32 %v320, 7
  %v322 = vsub.s32 %v319, %v321
  %v323 = vrot.slane %v288, %v322
  %v324 = vcombine.high %v323, %v323
  %v326 = vunpack.c.l.s4 1966171168
  %v327 = vunpack.c.0.s8 %v326
  %v328 = vlaneseq
  %v329 = vshrl.u32 %v328, 7
  %v330 = vsub.s32 %v327, %v329
  %v331 = vrot.slane %v323, %v330
  %v333 = vunpack.c.l.s4 1966171168
  %v334 = vunpack.c.0.s8 %v333
  %v335 = vlaneseq
  %v336 = vshrl.u32 %v335, 7
  %v337 = vsub.s32 %v334, %v336
  %v338 = vrot.slane %v324, %v337
  %v339 = vlaneseq
  %v340 = vshrl.u32 %v339, 7
  %v341 = vsub.s32 0, %v340
  %v342 = vrot.slane %v308, %v341
  %v343 = vlaneseq
  %v344 = vshrl.u32 %v343, 7
  %v345 = vsub.s32 0, %v344
  %v346 = vrot.slane %v315, %v345
  %v349 = vmul.f32 %v342, %v290
  %v350 = vmul.f32 %v346, %v290
  %v351 = vadd.f32 %v275, %v349
  %v352 = vadd.f32 %v276, %v350
  %v353 = vlaneseq
  %v354 = vshrl.u32 %v353, 7
  %v355 = vsub.s32 0, %v354
  %v356 = vrot.slane %v331, %v355
  %v357 = vlaneseq
  %v358 = vshrl.u32 %v357, 7
  %v359 = vsub.s32 0, %v358
  %v360 = vrot.slane %v338, %v359
  %v363 = vmul.f32 %v356, %v292
  %v364 = vmul.f32 %v360, %v292
  %v365 = vsub.f32 %v351, %v363
  %v366 = vsub.f32 %v352, %v364
  %v367 = vmul.f32 %v356, %v290
  %v368 = vmul.f32 %v360, %v290
  %v369 = vadd.f32 %v283, %v367
  %v370 = vadd.f32 %v284, %v368
  %v371 = vmul.f32 %v342, %v292
  %v372 = vmul.f32 %v346, %v292
  %v373 = vadd.f32 %v369, %v371
  %v374 = vadd.f32 %v370, %v372
  %375 = vst [vmem:[%s4] sm:$0xf] %v365
  %376 = vst [vmem:[%s4 + $0x4] sm:$0xf] %v366
  %377 = vst [vmem:[%s5] sm:$0xf] %v373
  %378 = vst [vmem:[%s5 + $0x4] sm:$0xf] %v374
  // Predicated region
  $region18: #{spectral_conv2d_forward.2} parent=0 // pred_check
    _
  $region19: #{spectral_conv2d_forward.2} parent=0 // pred_check_branch
    %380 = sbr.rel (0) target = $region21
  $region20: #{spectral_conv2d_forward.2} parent=0 // pred_region
    _
  $region21: #{spectral_conv2d_forward.2} parent=0 // pred_fallthru
    _
  // Predicated region
  $region22: #{spectral_conv2d_forward.2} parent=0 // pred_check
    _
  $region23: #{spectral_conv2d_forward.2} parent=0 // pred_check_branch
    %382 = sbr.rel (0) target = $region25
  $region24: #{spectral_conv2d_forward.2} parent=0 // pred_region
    _
  $region25: #{spectral_conv2d_forward.2} parent=0 // pred_fallthru
    _
  // Predicated region
  $region26: #{spectral_conv2d_forward.2} parent=0 // pred_check
    _
  $region27: #{spectral_conv2d_forward.2} parent=0 // pred_check_branch
    %384 = sbr.rel (0) target = $region29
  $region28: #{spectral_conv2d_forward.2} parent=0 // pred_region
    _
  $region29: #{spectral_conv2d_forward.2} parent=0 // pred_fallthru
    _
  // Predicated region
  $region30: #{spectral_conv2d_forward.2} parent=0 // pred_check
    _
  $region31: #{spectral_conv2d_forward.2} parent=0 // pred_check_branch
    %386 = sbr.rel (0) target = $region33
  $region32: #{spectral_conv2d_forward.2} parent=0 // pred_region
    _
  $region33: #{spectral_conv2d_forward.2} parent=0 // pred_fallthru
    _

// kernel: spectral_conv2d_forward.3
$region0: #{spectral_conv2d_forward.3}
  #allocation0 [shape = 'u32[]', space=smem, size = 0x4, offset = 0x4, fixed_abs, tag = 'smem constant byte address 0x4 - core index']
  #allocation1 [shape = 'u32[144,128]{1,0:T(1,128)}', space=vmem, size = 0x12000, scoped, tag = 'internal scratch']
  %s0 = inlined_call_operand.vmem [shape: f32[512,4], index: 0, kind: input, shape index: {}]
  %s1 = inlined_call_operand.vmem [shape: f32[512,4], index: 1, kind: input, shape index: {}]
  %s2 = inlined_call_operand.vmem [shape: f32[4,4], index: 2, kind: input, shape index: {}]
  %s3 = inlined_call_operand.vmem [shape: f32[1,4], index: 3, kind: input, shape index: {}]
  %s4 = inlined_call_operand.vmem [shape: f32[512,4], index: 4, kind: output, shape index: {}]
  %s5 = sld [smem:[#allocation0]]
  $region49: #{spectral_conv2d_forward.3} parent=0
    _
  %s7 = ssub.s32 1, %s5
  %s8 = scalar_select 0, %s7, %s5
  loop: start=0, step=1, limit=6
  $region2: #{spectral_conv2d_forward.3} parent=0 // loop_pre_header
    _
  $region3: #{spectral_conv2d_forward.3} parent=0 // loop_header
    %s10 = sphi 0, %s14
    %p11 = scmp.ge.s32.totalorder %s10, 6
    %s20 = sphi 0, %s22
    %s23 = sphi 0, %s20
    %s24 = sphi 0, %s23
    %s40 = sphi 0, %s24
    %s46 = sphi 0, %s48
    %s49 = sphi 0, %s46
    %s50 = sphi 0, %s49
    %s66 = sphi 0, %s50
    %s70 = sphi 0, %s70
    %s72 = sphi 0, %s70
    %s73 = sphi 0, %s72
    %s87 = sphi 0, %s73
    %s91 = sphi 0, %s91
    %s93 = sphi 0, %s91
    %s94 = sphi 0, %s93
    %s108 = sphi 0, %s94
    %s114 = sphi 0, %s116
    %s117 = sphi 0, %s114
    %s118 = sphi 0, %s117
    %s134 = sphi 0, %s118
  $region4: #{spectral_conv2d_forward.3} parent=0 // loop_header_branch
    %13 = sbr.rel (%p11) target = $region8
  $region5: #{spectral_conv2d_forward.3} parent=0 // loop_body
    %s15 = ssub.s32 %s10, 1
    %s16 = ssub.s32 %s10, 2
    %s17 = sadd.s32 %s10, 1
    %s18 = ssub.s32 %s10, %s17
    %p19 = scmp.eq.s32.totalorder %s18, 0
    %s21 = sadd.s32 %s20, 1
    %s22 = scalar_select %p19, %s20, %s21
    %p25 = pneg %p19
    %p26 = scmp.eq.s32.totalorder %s10, 3
    %p27 = por %p25, %p26
    %p28 = scmp.ne.s32.totalorder %s20, %s23
    %p29 = scmp.eq.s32.totalorder %s10, 0
    %p30 = por %p28, %p29
    %p31 = scmp.ne.s32.totalorder %s20, %s23
    %p32 = scmp.eq.s32.totalorder %s15, 3
    %p33 = por %p31, %p32
    %p34 = scmp.ne.s32.totalorder %s23, %s24
    %p35 = scmp.eq.s32.totalorder %s15, 0
    %p36 = por %p34, %p35
    %p37 = scmp.ne.s32.totalorder %s23, %s24
    %p38 = scmp.eq.s32.totalorder %s16, 3
    %p39 = por %p37, %p38
    %p41 = scmp.ne.s32.totalorder %s24, %s40
    %p42 = scmp.eq.s32.totalorder %s16, 0
    %p43 = por %p41, %p42
    %s44 = ssub.s32 %s10, %s17
    %p45 = scmp.eq.s32.totalorder %s44, 0
    %s47 = sadd.s32 %s46, 1
    %s48 = scalar_select %p45, %s46, %s47
    %p51 = pneg %p45
    %p52 = scmp.eq.s32.totalorder %s10, 3
    %p53 = por %p51, %p52
    %p54 = scmp.ne.s32.totalorder %s46, %s49
    %p55 = scmp.eq.s32.totalorder %s10, 0
    %p56 = por %p54, %p55
    %p57 = scmp.ne.s32.totalorder %s46, %s49
    %p58 = scmp.eq.s32.totalorder %s15, 3
    %p59 = por %p57, %p58
    %p60 = scmp.ne.s32.totalorder %s49, %s50
    %p61 = scmp.eq.s32.totalorder %s15, 0
    %p62 = por %p60, %p61
    %p63 = scmp.ne.s32.totalorder %s49, %s50
    %p64 = scmp.eq.s32.totalorder %s16, 3
    %p65 = por %p63, %p64
    %p67 = scmp.ne.s32.totalorder %s50, %s66
    %p68 = scmp.eq.s32.totalorder %s16, 0
    %p69 = por %p67, %p68
    %s71 = sadd.s32 %s70, 1
    %p74 = scmp.eq.s32.totalorder %s10, 3
    %p75 = scmp.ne.s32.totalorder %s70, %s72
    %p76 = scmp.eq.s32.totalorder %s10, 0
    %p77 = por %p75, %p76
    %p78 = scmp.ne.s32.totalorder %s70, %s72
    %p79 = scmp.eq.s32.totalorder %s15, 3
    %p80 = por %p78, %p79
    %p81 = scmp.ne.s32.totalorder %s72, %s73
    %p82 = scmp.eq.s32.totalorder %s15, 0
    %p83 = por %p81, %p82
    %p84 = scmp.ne.s32.totalorder %s72, %s73
    %p85 = scmp.eq.s32.totalorder %s16, 3
    %p86 = por %p84, %p85
    %p88 = scmp.ne.s32.totalorder %s73, %s87
    %p89 = scmp.eq.s32.totalorder %s16, 0
    %p90 = por %p88, %p89
    %s92 = sadd.s32 %s91, 1
    %p95 = scmp.eq.s32.totalorder %s10, 3
    %p96 = scmp.ne.s32.totalorder %s91, %s93
    %p97 = scmp.eq.s32.totalorder %s10, 0
    %p98 = por %p96, %p97
    %p99 = scmp.ne.s32.totalorder %s91, %s93
    %p100 = scmp.eq.s32.totalorder %s15, 3
    %p101 = por %p99, %p100
    %p102 = scmp.ne.s32.totalorder %s93, %s94
    %p103 = scmp.eq.s32.totalorder %s15, 0
    %p104 = por %p102, %p103
    %p105 = scmp.ne.s32.totalorder %s93, %s94
    %p106 = scmp.eq.s32.totalorder %s16, 3
    %p107 = por %p105, %p106
    %p109 = scmp.ne.s32.totalorder %s94, %s108
    %p110 = scmp.eq.s32.totalorder %s16, 0
    %p111 = por %p109, %p110
    %s112 = ssub.s32 %s10, %s17
    %p113 = scmp.eq.s32.totalorder %s112, 0
    %s115 = sadd.s32 %s114, 1
    %s116 = scalar_select %p113, %s114, %s115
    %p119 = pneg %p113
    %p120 = scmp.eq.s32.totalorder %s10, 3
    %p121 = por %p119, %p120
    %p122 = scmp.ne.s32.totalorder %s114, %s117
    %p123 = scmp.eq.s32.totalorder %s10, 0
    %p124 = por %p122, %p123
    %p125 = scmp.ne.s32.totalorder %s114, %s117
    %p126 = scmp.eq.s32.totalorder %s15, 3
    %p127 = por %p125, %p126
    %p128 = scmp.ne.s32.totalorder %s117, %s118
    %p129 = scmp.eq.s32.totalorder %s15, 0
    %p130 = por %p128, %p129
    %p131 = scmp.ne.s32.totalorder %s117, %s118
    %p132 = scmp.eq.s32.totalorder %s16, 3
    %p133 = por %p131, %p132
    %p135 = scmp.ne.s32.totalorder %s118, %s134
    %p136 = scmp.eq.s32.totalorder %s16, 0
    %p137 = por %p135, %p136
    %p138 = scmp.le.s32.totalorder 1, %s10
    %p139 = scmp.lt.s32.totalorder %s10, 5
    %p140 = pnand %p138, %p139
    %p141 = pneg %p140
    // Predicated region
    $region9: #{spectral_conv2d_forward.3} parent=5 // pred_check
      _
    $region10: #{spectral_conv2d_forward.3} parent=5 // pred_check_branch
      %143 = sbr.rel (%p140) target = $region12
    $region11: #{spectral_conv2d_forward.3} parent=5 // pred_region
      %s144 = ssub.s32 %s10, 1
      // Predicated region
      $region13: #{spectral_conv2d_forward.3} parent=11 // pred_check
        %p145 = pneg %p83
      $region14: #{spectral_conv2d_forward.3} parent=11 // pred_check_branch
        %147 = sbr.rel (%p145) target = $region16
      $region15: #{spectral_conv2d_forward.3} parent=11 // pred_region
        _
      $region16: #{spectral_conv2d_forward.3} parent=11 // pred_fallthru
        _
      // Predicated region
      $region17: #{spectral_conv2d_forward.3} parent=11 // pred_check
        %p148 = pneg %p104
      $region18: #{spectral_conv2d_forward.3} parent=11 // pred_check_branch
        %150 = sbr.rel (%p148) target = $region20
      $region19: #{spectral_conv2d_forward.3} parent=11 // pred_region
        _
      $region20: #{spectral_conv2d_forward.3} parent=11 // pred_fallthru
        _
    $region12: #{spectral_conv2d_forward.3} parent=5 // pred_fallthru
      _
    %p151 = scmp.lt.s32.totalorder %s10, 4
    // Predicated region
    $region21: #{spectral_conv2d_forward.3} parent=5 // pred_check
      %p152 = pneg %p151
    $region22: #{spectral_conv2d_forward.3} parent=5 // pred_check_branch
      %154 = sbr.rel (%p152) target = $region24
    $region23: #{spectral_conv2d_forward.3} parent=5 // pred_region
      // Predicated region
      $region25: #{spectral_conv2d_forward.3} parent=23 // pred_check
        %p155 = pneg %p30
      $region26: #{spectral_conv2d_forward.3} parent=23 // pred_check_branch
        %157 = sbr.rel (%p155) target = $region28
      $region27: #{spectral_conv2d_forward.3} parent=23 // pred_region
        %s158 = smul.u32 16, %s10
        %p159 = scmp.lt.s32.totalorder %s158, 63
        %s160 = scalar_select %p159, %s158, 63
        %s161 = smul.addr %s160, 8
        %s162 = scalar_lea.vmem %s0, %s161
        %s163 = smul.u32 16, %s10
      $region28: #{spectral_conv2d_forward.3} parent=23 // pred_fallthru
        _
      // Predicated region
      $region29: #{spectral_conv2d_forward.3} parent=23 // pred_check
        %p164 = pneg %p56
      $region30: #{spectral_conv2d_forward.3} parent=23 // pred_check_branch
        %166 = sbr.rel (%p164) target = $region32
      $region31: #{spectral_conv2d_forward.3} parent=23 // pred_region
        %s167 = smul.u32 16, %s10
        %p168 = scmp.lt.s32.totalorder %s167, 63
        %s169 = scalar_select %p168, %s167, 63
        %s170 = smul.addr %s169, 8
        %s171 = scalar_lea.vmem %s1, %s170
        %s172 = smul.u32 16, %s10
      $region32: #{spectral_conv2d_forward.3} parent=23 // pred_fallthru
        _
    $region24: #{spectral_conv2d_forward.3} parent=5 // pred_fallthru
      _
    %p173 = scmp.le.s32.totalorder 1, %s10
    %p174 = scmp.lt.s32.totalorder %s10, 5
    %p175 = pnand %p173, %p174
    %p176 = pneg %p175
    // Predicated region
    $region33: #{spectral_conv2d_forward.3} parent=5 // pred_check
      _
    $region34: #{spectral_conv2d_forward.3} parent=5 // pred_check_branch
      %178 = sbr.rel (%p175) target = $region36
    $region35: #{spectral_conv2d_forward.3} parent=5 // pred_region
      %s179 = ssub.s32 %s10, 1
      %s180 = smul.u32 16, %s15
      %p181 = scmp.lt.s32.totalorder %s180, 63
      %s182 = scalar_select %p181, %s180, 63
      %s183 = smul.addr %s182, 8
      %s184 = scalar_lea.vmem %s0, %s183
      %p185 = pneg %p36
      %p186 = pneg %p33
      %s187 = smul.u32 16, %s15
      %p188 = scmp.lt.s32.totalorder %s187, 63
      %s189 = scalar_select %p188, %s187, 63
      %s190 = smul.addr %s189, 8
      %s191 = scalar_lea.vmem %s1, %s190
      %p192 = pneg %p62
      %p193 = pneg %p59
      %p194 = pneg %p83
      %p195 = pneg %p80
      %p196 = pneg %p104
      %p197 = pneg %p101
      %p198 = pneg %p130
      %p199 = pneg %p127
      %s200 = smul.u32 16, %s15
      %p201 = scmp.lt.s32.totalorder %s200, 63
      %s202 = scalar_select %p201, %s200, 63
      %s203 = smul.addr %s202, 8
      %s204 = scalar_lea.vmem %s4, %s203
      %s205 = smul.u32 16, %s15
      %p206 = scmp.lt.s32.totalorder %s205, 63
      %s207 = scalar_select %p206, %s205, 63
      %s208 = smul.addr %s207, 8
      %s209 = scalar_lea.vmem %s0, %s208
      %s210 = smul.u32 16, %s15
      %s211 = smul.u32 16, %s15
      %p212 = scmp.lt.s32.totalorder %s211, 63
      %s213 = scalar_select %p212, %s211, 63
      %s214 = smul.addr %s213, 8
      %s215 = scalar_lea.vmem %s1, %s214
      %s216 = smul.u32 16, %s15
      %s217 = smul.u32 16, %s15
      %p218 = scmp.lt.s32.totalorder %s217, 63
      %s219 = scalar_select %p218, %s217, 63
      %s220 = smul.addr %s219, 8
      %s221 = scalar_lea.vmem %s4, %s220
      %s222 = smul.u32 16, %s15
      %v223 = vld [vmem:[%s209] sm:$0xff]
      %v224 = vld [vmem:[%s209 + $0x8] sm:$0xff]
      %v225 = vld [vmem:[%s209 + $0x10] sm:$0xff]
      %v226 = vld [vmem:[%s209 + $0x18] sm:$0xff]
      %v227 = vld [vmem:[%s209 + $0x20] sm:$0xff]
      %v228 = vld [vmem:[%s209 + $0x28] sm:$0xff]
      %v229 = vld [vmem:[%s209 + $0x30] sm:$0xff]
      %v230 = vld [vmem:[%s209 + $0x38] sm:$0xff]
      %v231 = vld [vmem:[%s209 + $0x40] sm:$0xff]
      %v232 = vld [vmem:[%s209 + $0x48] sm:$0xff]
      %v233 = vld [vmem:[%s209 + $0x50] sm:$0xff]
      %v234 = vld [vmem:[%s209 + $0x58] sm:$0xff]
      %v235 = vld [vmem:[%s209 + $0x60] sm:$0xff]
      %v236 = vld [vmem:[%s209 + $0x68] sm:$0xff]
      %v237 = vld [vmem:[%s209 + $0x70] sm:$0xff]
      %v238 = vld [vmem:[%s209 + $0x78] sm:$0xff]
      %v239 = vld [vmem:[%s2] sm:$0xf]
      %v240 = vld [vmem:[%s3] sm:$0x1]
      %v242 = vlaneseq
      %v243 = vshrl.u32 %v242, 7
      %v244 = vsub.s32 0, %v243
      %v245 = vrot.slane %v240, %v244
      %vm247 = vcmask 31744
      %v249 = vsel %vm247, %v223, 0
      %v252 = vsel %vm247, %v224, 0
      %v255 = vsel %vm247, %v225, 0
      %v258 = vsel %vm247, %v226, 0
      %v261 = vsel %vm247, %v227, 0
      %v264 = vsel %vm247, %v228, 0
      %v267 = vsel %vm247, %v229, 0
      %v270 = vsel %vm247, %v230, 0
      %v273 = vsel %vm247, %v231, 0
      %v276 = vsel %vm247, %v232, 0
      %v279 = vsel %vm247, %v233, 0
      %v282 = vsel %vm247, %v234, 0
      %v285 = vsel %vm247, %v235, 0
      %v288 = vsel %vm247, %v236, 0
      %v291 = vsel %vm247, %v237, 0
      %v294 = vsel %vm247, %v238, 0
      %vm296 = vcmask 1043456
      %v298 = vsel %vm296, %v239, 0
      %300 = vmatprep.subr.mxu0 0.0
      %301 = vmatpush1.msra.mxu0 %v298
      %302 = vmatprep.subr.mxu0 0.0
      %303 = vmatpush1.msra.mxu0 0.0
      %304 = vmatprep.subr.mxu0 0.0
      %305 = vmatpush1.msra.mxu0 0.0
      %306 = vmatprep.subr.mxu0 0.0
      %307 = vmatpush1.msra.mxu0 0.0
      %308 = vmatprep.subr.mxu0 0.0
      %309 = vmatpush1.msra.mxu0 0.0
      %310 = vmatprep.subr.mxu0 0.0
      %311 = vmatpush1.msra.mxu0 0.0
      %312 = vmatprep.subr.mxu0 0.0
      %313 = vmatpush1.msra.mxu0 0.0
      %314 = vmatprep.subr.mxu0 0.0
      %315 = vmatpush1.msra.mxu0 0.0
      %316 = vmatprep.subr.mxu0 0.0
      %317 = vmatpush1.msra.mxu0 0.0
      %318 = vmatprep.subr.mxu0 0.0
      %319 = vmatpush1.msra.mxu0 0.0
      %320 = vmatprep.subr.mxu0 0.0
      %321 = vmatpush1.msra.mxu0 0.0
      %322 = vmatprep.subr.mxu0 0.0
      %323 = vmatpush1.msra.mxu0 0.0
      %324 = vmatprep.subr.mxu0 0.0
      %325 = vmatpush1.msra.mxu0 0.0
      %326 = vmatprep.subr.mxu0 0.0
      %327 = vmatpush1.msra.mxu0 0.0
      %328 = vmatprep.subr.mxu0 0.0
      %329 = vmatpush1.msra.mxu0 0.0
      %330 = vmatprep.subr.mxu0 0.0
      %331 = vmatpush1.msra.mxu0 0.0
      %332 = vmatprep.subr.mxu0 0.0
      %333 = vmatpush1.msra.mxu0 0.0
      %334 = vmatprep.subr.mxu0 0.0
      %335 = vmatpush1.msra.mxu0 0.0
      %336 = vmatprep.subr.mxu0 0.0
      %337 = vmatpush1.msra.mxu0 0.0
      %338 = vmatprep.subr.mxu0 0.0
      %339 = vmatpush1.msra.mxu0 0.0
      %340 = vmatprep.subr.mxu0 0.0
      %341 = vmatpush1.msra.mxu0 0.0
      %342 = vmatprep.subr.mxu0 0.0
      %343 = vmatpush1.msra.mxu0 0.0
      %344 = vmatprep.subr.mxu0 0.0
      %345 = vmatpush1.msra.mxu0 0.0
      %346 = vmatprep.subr.mxu0 0.0
      %347 = vmatpush1.msra.mxu0 0.0
      %348 = vmatprep.subr.mxu0 0.0
      %349 = vmatpush1.msra.mxu0 0.0
      %350 = vmatprep.subr.mxu0 0.0
      %351 = vmatpush1.msra.mxu0 0.0
      %352 = vmatprep.subr.mxu0 0.0
      %353 = vmatpush1.msra.mxu0 0.0
      %354 = vmatprep.subr.mxu0 0.0
      %355 = vmatpush1.msra.mxu0 0.0
      %356 = vmatprep.subr.mxu0 0.0
      %357 = vmatpush1.msra.mxu0 0.0
      %358 = vmatprep.subr.mxu0 0.0
      %359 = vmatpush1.msra.mxu0 0.0
      %360 = vmatprep.subr.mxu0 0.0
      %361 = vmatpush1.msra.mxu0 0.0
      %362 = vmatprep.subr.mxu0 0.0
      %363 = vmatpush1.msra.mxu0 0.0
      %364 = vmatprep.mubr.f32.mxu0 0.0
      %365 = vmatmul.mubr.f32.gmra.mrb[0].mxu0 %v249
      %v366 = vpop.f32.mrb[0].mxu0
      %v367 = vadd.f32 %v245, %v366
      %v368 = vpop.f32.mrb[0].mxu0
      %369 = vmatprep.mubr.f32.mxu0 0.0
      %370 = vmatmul.mubr.f32.gmra.mrb[0].mxu0 %v252
      %v371 = vpop.f32.mrb[0].mxu0
      %v372 = vadd.f32 %v245, %v371
      %v373 = vpop.f32.mrb[0].mxu0
      %374 = vmatprep.mubr.f32.mxu0 0.0
      %375 = vmatmul.mubr.f32.gmra.mrb[0].mxu0 %v255
      %v376 = vpop.f32.mrb[0].mxu0
      %v377 = vadd.f32 %v245, %v376
      %v378 = vpop.f32.mrb[0].mxu0
      %379 = vmatprep.mubr.f32.mxu0 0.0
      %380 = vmatmul.mubr.f32.gmra.mrb[0].mxu0 %v258
      %v381 = vpop.f32.mrb[0].mxu0
      %v382 = vadd.f32 %v245, %v381
      %v383 = vpop.f32.mrb[0].mxu0
      %384 = vmatprep.mubr.f32.mxu0 0.0
      %385 = vmatmul.mubr.f32.gmra.mrb[0].mxu0 %v261
      %v386 = vpop.f32.mrb[0].mxu0
      %v387 = vadd.f32 %v245, %v386
      %v388 = vpop.f32.mrb[0].mxu0
      %389 = vmatprep.mubr.f32.mxu0 0.0
      %390 = vmatmul.mubr.f32.gmra.mrb[0].mxu0 %v264
      %v391 = vpop.f32.mrb[0].mxu0
      %v392 = vadd.f32 %v245, %v391
      %v393 = vpop.f32.mrb[0].mxu0
      %394 = vmatprep.mubr.f32.mxu0 0.0
      %395 = vmatmul.mubr.f32.gmra.mrb[0].mxu0 %v267
      %v396 = vpop.f32.mrb[0].mxu0
      %v397 = vadd.f32 %v245, %v396
      %v398 = vpop.f32.mrb[0].mxu0
      %399 = vmatprep.mubr.f32.mxu0 0.0
      %400 = vmatmul.mubr.f32.gmra.mrb[0].mxu0 %v270
      %v401 = vpop.f32.mrb[0].mxu0
      %v402 = vadd.f32 %v245, %v401
      %v403 = vpop.f32.mrb[0].mxu0
      %404 = vmatprep.mubr.f32.mxu0 0.0
      %405 = vmatmul.mubr.f32.gmra.mrb[0].mxu0 %v273
      %v406 = vpop.f32.mrb[0].mxu0
      %v407 = vadd.f32 %v245, %v406
      %v408 = vpop.f32.mrb[0].mxu0
      %409 = vmatprep.mubr.f32.mxu0 0.0
      %410 = vmatmul.mubr.f32.gmra.mrb[0].mxu0 %v276
      %v411 = vpop.f32.mrb[0].mxu0
      %v412 = vadd.f32 %v245, %v411
      %v413 = vpop.f32.mrb[0].mxu0
      %414 = vmatprep.mubr.f32.mxu0 0.0
      %415 = vmatmul.mubr.f32.gmra.mrb[0].mxu0 %v279
      %v416 = vpop.f32.mrb[0].mxu0
      %v417 = vadd.f32 %v245, %v416
      %v418 = vpop.f32.mrb[0].mxu0
      %419 = vmatprep.mubr.f32.mxu0 0.0
      %420 = vmatmul.mubr.f32.gmra.mrb[0].mxu0 %v282
      %v421 = vpop.f32.mrb[0].mxu0
      %v422 = vadd.f32 %v245, %v421
      %v423 = vpop.f32.mrb[0].mxu0
      %424 = vmatprep.mubr.f32.mxu0 0.0
      %425 = vmatmul.mubr.f32.gmra.mrb[0].mxu0 %v285
      %v426 = vpop.f32.mrb[0].mxu0
      %v427 = vadd.f32 %v245, %v426
      %v428 = vpop.f32.mrb[0].mxu0
      %429 = vmatprep.mubr.f32.mxu0 0.0
      %430 = vmatmul.mubr.f32.gmra.mrb[0].mxu0 %v288
      %v431 = vpop.f32.mrb[0].mxu0
      %v432 = vadd.f32 %v245, %v431
      %v433 = vpop.f32.mrb[0].mxu0
      %434 = vmatprep.mubr.f32.mxu0 0.0
      %435 = vmatmul.mubr.f32.gmra.mrb[0].mxu0 %v291
      %v436 = vpop.f32.mrb[0].mxu0
      %v437 = vadd.f32 %v245, %v436
      %v438 = vpop.f32.mrb[0].mxu0
      %439 = vmatprep.mubr.f32.mxu0 0.0
      %440 = vmatmul.mubr.f32.gmra.mrb[0].mxu0 %v294
      %v441 = vpop.f32.mrb[0].mxu0
      %v442 = vadd.f32 %v245, %v441
      %v443 = vpop.f32.mrb[0].mxu0
      %444 = vdwg.mxu0
      %v445 = vld [vmem:[%s215] sm:$0xff]
      %v446 = vld [vmem:[%s215 + $0x8] sm:$0xff]
      %v447 = vld [vmem:[%s215 + $0x10] sm:$0xff]
      %v448 = vld [vmem:[%s215 + $0x18] sm:$0xff]
      %v449 = vld [vmem:[%s215 + $0x20] sm:$0xff]
      %v450 = vld [vmem:[%s215 + $0x28] sm:$0xff]
      %v451 = vld [vmem:[%s215 + $0x30] sm:$0xff]
      %v452 = vld [vmem:[%s215 + $0x38] sm:$0xff]
      %v453 = vld [vmem:[%s215 + $0x40] sm:$0xff]
      %v454 = vld [vmem:[%s215 + $0x48] sm:$0xff]
      %v455 = vld [vmem:[%s215 + $0x50] sm:$0xff]
      %v456 = vld [vmem:[%s215 + $0x58] sm:$0xff]
      %v457 = vld [vmem:[%s215 + $0x60] sm:$0xff]
      %v458 = vld [vmem:[%s215 + $0x68] sm:$0xff]
      %v459 = vld [vmem:[%s215 + $0x70] sm:$0xff]
      %v460 = vld [vmem:[%s215 + $0x78] sm:$0xff]
      %v461 = vadd.f32 %v445, %v367
      %v462 = vadd.f32 %v446, %v372
      %v463 = vadd.f32 %v447, %v377
      %v464 = vadd.f32 %v448, %v382
      %v465 = vadd.f32 %v449, %v387
      %v466 = vadd.f32 %v450, %v392
      %v467 = vadd.f32 %v451, %v397
      %v468 = vadd.f32 %v452, %v402
      %v469 = vadd.f32 %v453, %v407
      %v470 = vadd.f32 %v454, %v412
      %v471 = vadd.f32 %v455, %v417
      %v472 = vadd.f32 %v456, %v422
      %v473 = vadd.f32 %v457, %v427
      %v474 = vadd.f32 %v458, %v432
      %v475 = vadd.f32 %v459, %v437
      %v476 = vadd.f32 %v460, %v442
      %v477 = vxor.u32 %v461, 2147483648
      %v478 = vxor.u32 %v462, 2147483648
      %v479 = vxor.u32 %v463, 2147483648
      %v480 = vxor.u32 %v464, 2147483648
      %v481 = vxor.u32 %v465, 2147483648
      %v482 = vxor.u32 %v466, 2147483648
      %v483 = vxor.u32 %v467, 2147483648
      %v484 = vxor.u32 %v468, 2147483648
      %v485 = vxor.u32 %v469, 2147483648
      %v486 = vxor.u32 %v470, 2147483648
      %v487 = vxor.u32 %v471, 2147483648
      %v488 = vxor.u32 %v472, 2147483648
      %v489 = vxor.u32 %v473, 2147483648
      %v490 = vxor.u32 %v474, 2147483648
      %v491 = vxor.u32 %v475, 2147483648
      %v492 = vxor.u32 %v476, 2147483648
      %v493 = vmul.f32 %v477, 1.442695
      %v494 = vpow.pop %v493
      %v495 = vmul.f32 %v478, 1.442695
      %v496 = vpow.pop %v495
      %v497 = vmul.f32 %v479, 1.442695
      %v498 = vpow.pop %v497
      %v499 = vmul.f32 %v480, 1.442695
      %v500 = vpow.pop %v499
      %v501 = vmul.f32 %v481, 1.442695
      %v502 = vpow.pop %v501
      %v503 = vmul.f32 %v482, 1.442695
      %v504 = vpow.pop %v503
      %v505 = vmul.f32 %v483, 1.442695
      %v506 = vpow.pop %v505
      %v507 = vmul.f32 %v484, 1.442695
      %v508 = vpow.pop %v507
      %v509 = vmul.f32 %v485, 1.442695
      %v510 = vpow.pop %v509
      %v511 = vmul.f32 %v486, 1.442695
      %v512 = vpow.pop %v511
      %v513 = vmul.f32 %v487, 1.442695
      %v514 = vpow.pop %v513
      %v515 = vmul.f32 %v488, 1.442695
      %v516 = vpow.pop %v515
      %v517 = vmul.f32 %v489, 1.442695
      %v518 = vpow.pop %v517
      %v519 = vmul.f32 %v490, 1.442695
      %v520 = vpow.pop %v519
      %v521 = vmul.f32 %v491, 1.442695
      %v522 = vpow.pop %v521
      %v523 = vmul.f32 %v492, 1.442695
      %v524 = vpow.pop %v523
      %v525 = vadd.f32 %v494, 1.0
      %v526 = vadd.f32 %v496, 1.0
      %v527 = vadd.f32 %v498, 1.0
      %v528 = vadd.f32 %v500, 1.0
      %v529 = vadd.f32 %v502, 1.0
      %v530 = vadd.f32 %v504, 1.0
      %v531 = vadd.f32 %v506, 1.0
      %v532 = vadd.f32 %v508, 1.0
      %v533 = vadd.f32 %v510, 1.0
      %v534 = vadd.f32 %v512, 1.0
      %v535 = vadd.f32 %v514, 1.0
      %v536 = vadd.f32 %v516, 1.0
      %v537 = vadd.f32 %v518, 1.0
      %v538 = vadd.f32 %v520, 1.0
      %v539 = vadd.f32 %v522, 1.0
      %v540 = vadd.f32 %v524, 1.0
      %v541 = vrcp.pop %v525
      %v542 = vmul.f32 1.0, %v541
      %v543 = vrcp.pop %v526
      %v544 = vmul.f32 1.0, %v543
      %v545 = vrcp.pop %v527
      %v546 = vmul.f32 1.0, %v545
      %v547 = vrcp.pop %v528
      %v548 = vmul.f32 1.0, %v547
      %v549 = vrcp.pop %v529
      %v550 = vmul.f32 1.0, %v549
      %v551 = vrcp.pop %v530
      %v552 = vmul.f32 1.0, %v551
      %v553 = vrcp.pop %v531
      %v554 = vmul.f32 1.0, %v553
      %v555 = vrcp.pop %v532
      %v556 = vmul.f32 1.0, %v555
      %v557 = vrcp.pop %v533
      %v558 = vmul.f32 1.0, %v557
      %v559 = vrcp.pop %v534
      %v560 = vmul.f32 1.0, %v559
      %v561 = vrcp.pop %v535
      %v562 = vmul.f32 1.0, %v561
      %v563 = vrcp.pop %v536
      %v564 = vmul.f32 1.0, %v563
      %v565 = vrcp.pop %v537
      %v566 = vmul.f32 1.0, %v565
      %v567 = vrcp.pop %v538
      %v568 = vmul.f32 1.0, %v567
      %v569 = vrcp.pop %v539
      %v570 = vmul.f32 1.0, %v569
      %v571 = vrcp.pop %v540
      %v572 = vmul.f32 1.0, %v571
      %v573 = vmul.f32 %v461, %v542
      %v574 = vmul.f32 %v462, %v544
      %v575 = vmul.f32 %v463, %v546
      %v576 = vmul.f32 %v464, %v548
      %v577 = vmul.f32 %v465, %v550
      %v578 = vmul.f32 %v466, %v552
      %v579 = vmul.f32 %v467, %v554
      %v580 = vmul.f32 %v468, %v556
      %v581 = vmul.f32 %v469, %v558
      %v582 = vmul.f32 %v470, %v560
      %v583 = vmul.f32 %v471, %v562
      %v584 = vmul.f32 %v472, %v564
      %v585 = vmul.f32 %v473, %v566
      %v586 = vmul.f32 %v474, %v568
      %v587 = vmul.f32 %v475, %v570
      %v588 = vmul.f32 %v476, %v572
      %589 = vst.msk [vmem:[%s221] sm:$0xff] %vm247, %v573
      %590 = vst.msk [vmem:[%s221 + $0x8] sm:$0xff] %vm247, %v574
      %591 = vst.msk [vmem:[%s221 + $0x10] sm:$0xff] %vm247, %v575
      %592 = vst.msk [vmem:[%s221 + $0x18] sm:$0xff] %vm247, %v576
      %593 = vst.msk [vmem:[%s221 + $0x20] sm:$0xff] %vm247, %v577
      %594 = vst.msk [vmem:[%s221 + $0x28] sm:$0xff] %vm247, %v578
      %595 = vst.msk [vmem:[%s221 + $0x30] sm:$0xff] %vm247, %v579
      %596 = vst.msk [vmem:[%s221 + $0x38] sm:$0xff] %vm247, %v580
      %597 = vst.msk [vmem:[%s221 + $0x40] sm:$0xff] %vm247, %v581
      %598 = vst.msk [vmem:[%s221 + $0x48] sm:$0xff] %vm247, %v582
      %599 = vst.msk [vmem:[%s221 + $0x50] sm:$0xff] %vm247, %v583
      %600 = vst.msk [vmem:[%s221 + $0x58] sm:$0xff] %vm247, %v584
      %601 = vst.msk [vmem:[%s221 + $0x60] sm:$0xff] %vm247, %v585
      %602 = vst.msk [vmem:[%s221 + $0x68] sm:$0xff] %vm247, %v586
      %603 = vst.msk [vmem:[%s221 + $0x70] sm:$0xff] %vm247, %v587
      %604 = vst.msk [vmem:[%s221 + $0x78] sm:$0xff] %vm247, %v588
      %s605 = smul.u32 16, %s15
      %p606 = scmp.lt.s32.totalorder %s605, 63
      %s607 = scalar_select %p606, %s605, 63
      %s608 = smul.addr %s607, 8
      %s609 = scalar_lea.vmem %s4, %s608
      // Predicated region
      $region37: #{spectral_conv2d_forward.3} parent=35 // pred_check
        %p610 = pneg %p127
      $region38: #{spectral_conv2d_forward.3} parent=35 // pred_check_branch
        %612 = sbr.rel (%p610) target = $region40
      $region39: #{spectral_conv2d_forward.3} parent=35 // pred_region
        %s613 = smul.u32 16, %s15
      $region40: #{spectral_conv2d_forward.3} parent=35 // pred_fallthru
        _
    $region36: #{spectral_conv2d_forward.3} parent=5 // pred_fallthru
      _
    %p614 = scmp.le.s32.totalorder 2, %s10
    // Predicated region
    $region41: #{spectral_conv2d_forward.3} parent=5 // pred_check
      %p615 = pneg %p614
    $region42: #{spectral_conv2d_forward.3} parent=5 // pred_check_branch
      %617 = sbr.rel (%p615) target = $region44
    $region43: #{spectral_conv2d_forward.3} parent=5 // pred_region
      %s618 = ssub.s32 %s10, 2
      // Predicated region
      $region45: #{spectral_conv2d_forward.3} parent=43 // pred_check
        %p619 = pneg %p133
      $region46: #{spectral_conv2d_forward.3} parent=43 // pred_check_branch
        %621 = sbr.rel (%p619) target = $region48
      $region47: #{spectral_conv2d_forward.3} parent=43 // pred_region
        %s622 = smul.u32 16, %s16
        %p623 = scmp.lt.s32.totalorder %s622, 63
        %s624 = scalar_select %p623, %s622, 63
        %s625 = smul.addr %s624, 8
        %s626 = scalar_lea.vmem %s4, %s625
      $region48: #{spectral_conv2d_forward.3} parent=43 // pred_fallthru
        _
    $region44: #{spectral_conv2d_forward.3} parent=5 // pred_fallthru
      _
  $region6: #{spectral_conv2d_forward.3} parent=0 // loop_footer
    %s14 = sadd.s32 1, %s10
  $region7: #{spectral_conv2d_forward.3} parent=0 // loop_footer_branch
    %9 = sbr.rel target = $region3
  $region8: #{spectral_conv2d_forward.3} parent=0 // loop_exit
    _

</llo_original>
